<compile_context>
chip_gen: v7x
topology: tpu7x:2x2x1
jax: 0.10.0
libtpu: 0.0.40
codegen_flags: <defaults>
</compile_context>

<pallas_src>
import functools

import jax
import jax.numpy as jnp
from jax.experimental import pallas as pl
from jax.experimental.pallas import tpu as pltpu

CONV_K = 8                  # nn.Conv1d(kernel_size=8, stride=1, padding='same')
POOL_K = 7                  # nn.MaxPool1d(kernel_size=7, stride=1, padding=3)
POOL_PAD = POOL_K // 2      # 3
PAD_L = (CONV_K - 1) // 2   # 3 (left)  -- torch 'same' split for even K
PAD_R = CONV_K - 1 - PAD_L  # 4 (right)
OUT_LANES = 128             # lane-dense output block; column 0 holds the result
TB_TARGET = 16              # fixed batch-tile size (decoupled from B)

# bf16 matmul operands, f32 accumulation (preferred_element_type).  Flip to
# jnp.float32 for bit-closer parity with the f32 torch reference.
MATMUL_DTYPE = jnp.bfloat16


# ---------------------------------------------------------------------------
# Fused kernel: conv1 -> ReLU -> conv2 -> ReLU -> maxpool -> flatten -> fc1
#               -> ReLU -> fc2   (one whole batch tile of TB samples per step)
# ---------------------------------------------------------------------------
def _fused_head_kernel(x_ref, w1_ref, b1_ref, w2_ref, b2_ref,
                       wf1_ref, bf1_ref, wf2_ref, bf2_ref, o_ref,
                       pad_ref,
                       *, L, C, TB, F_PAD):
    """
    x_ref  : (TB, L+K-1, C) latent tile, length-major, zero-padded for conv1 'same'
    w1_ref : (K*C, C)  conv1 weight in im2col order (k*C + c_in, c_out)
    w2_ref : (K*C, C)  conv2 weight, same order
    b1/b2  : (1, C)    conv biases (f32 lane rows)
    wf1_ref: (L*C + F_PAD, 64)  fc1 weight, rows in (l*C + c) order
    bf1_ref: (1, 64);  wf2_ref: (1, 64);  bf2_ref: (1, 1)
    o_ref  : (TB, 1, OUT_LANES)
    pad_ref: (TB, L+K-1, C) f32 scratch holding 'same'-padded activations
    """
    K = CONV_K
    Lp = L + K - 1

    # Zero the pad rows of the scratch once per grid step; they stay zero for
    # both the conv2 'same' padding and the maxpool zero padding below.
    pad_ref[:, 0:PAD_L, :] = jnp.zeros((TB, PAD_L, C), jnp.float32)
    pad_ref[:, PAD_L + L:Lp, :] = jnp.zeros((TB, PAD_R, C), jnp.float32)

    b1 = b1_ref[...]
    b2 = b2_ref[...]

    # ---- conv1: one batched im2col matmul (M = TB*L, contraction K*C) -------
    x = x_ref[...]                                                  # (TB, Lp, C) bf16
    cols = jnp.concatenate([x[:, k:k + L, :] for k in range(K)], axis=-1)
    cols = cols.reshape(TB * L, K * C)                              # one relayout / tile
    h = jnp.dot(cols, w1_ref[...], preferred_element_type=jnp.float32) + b1
    h = jnp.maximum(h, 0.0)                                         # (TB*L, C) f32

    # write into the padded scratch ('same' zero padding for conv2)
    pad_ref[:, PAD_L:PAD_L + L, :] = h.reshape(TB, L, C)

    # ---- conv2: batched im2col from the padded scratch ----------------------
    hp = pad_ref[...]                                               # (TB, Lp, C) f32
    cols = jnp.concatenate([hp[:, k:k + L, :] for k in range(K)], axis=-1)
    cols = cols.reshape(TB * L, K * C).astype(MATMUL_DTYPE)
    h = jnp.dot(cols, w2_ref[...], preferred_element_type=jnp.float32) + b2
    h = jnp.maximum(h, 0.0)                                         # (TB*L, C) f32

    # ---- maxpool k=7, s=1, p=3 ----------------------------------------------
    # Zero padding is exact ONLY because h >= 0 after the ReLU above.
    pad_ref[:, PAD_L:PAD_L + L, :] = h.reshape(TB, L, C)
    hp = pad_ref[:, 0:L + 2 * POOL_PAD, :]                          # (TB, L+6, C)
    # log-depth sliding-max tree: window 2 -> 4 -> 7 (3 maxes instead of 6)
    t2 = jnp.maximum(hp[:, 0:L + 5, :], hp[:, 1:L + 6, :])
    t4 = jnp.maximum(t2[:, 0:L + 3, :], t2[:, 2:L + 5, :])
    pooled = jnp.maximum(t4[:, 0:L, :], t4[:, 3:L + 3, :])          # (TB, L, C) f32

    # ---- flatten (single reshape per tile) + fc1 + ReLU ----------------------
    flat = pooled.reshape(TB, L * C)                                # order (l*C + c)
    if F_PAD:
        flat = jnp.concatenate(
            [flat, jnp.zeros((TB, F_PAD), jnp.float32)], axis=-1)   # (TB, Fp)
    z = jnp.dot(flat.astype(MATMUL_DTYPE), wf1_ref[...],
                preferred_element_type=jnp.float32) + bf1_ref[...]
    z = jnp.maximum(z, 0.0)                                         # (TB, 64) f32

    # ---- fc2 (64 -> 1): VPU broadcast-multiply + lane reduction (skip MXU) ---
    y = jnp.sum(z * wf2_ref[...], axis=1, keepdims=True) + bf2_ref[...]   # (TB, 1)

    # lane-dense store; the wrapper slices column 0.
    o_ref[:, 0, :] = jnp.broadcast_to(y, (TB, OUT_LANES)).astype(o_ref.dtype)


# ---------------------------------------------------------------------------
# Wrapper
# ---------------------------------------------------------------------------
@jax.jit
def expression_predictor_forward(latent, params):
    """latent: (B, base_dim, seq_length) f32 — the frozen base model's latent."""
    B, C, L = latent.shape
    K = params["conv1_w"].shape[-1]
    H1 = params["fc1_w"].shape[0]
    assert K == CONV_K
    Lp = L + K - 1
    F = L * C
    Fp = ((F + 127) // 128) * 128             # fc1 contraction padded to 128 lanes
    f_pad = Fp - F

    # fixed small batch tile, decoupled from B; grid shards across TensorCores.
    TB = min(TB_TARGET, B)
    G = -(-B // TB)
    Bp = G * TB

    # ---- glue: layout plumbing done once in the wrapper -----------------------
    # latent (B, C, L) -> length-major (B, L, C) bf16, zero-padded along L for
    # conv1 'same' and along B up to a multiple of TB.
    xl = jnp.transpose(latent, (0, 2, 1)).astype(MATMUL_DTYPE)
    xlp = jnp.pad(xl, ((0, Bp - B), (PAD_L, PAD_R), (0, 0)))

    # conv weights (C_out, C_in, K) -> im2col (K*C_in, C_out); biases as lane rows.
    w1m = jnp.transpose(params["conv1_w"], (2, 1, 0)).reshape(K * C, C).astype(MATMUL_DTYPE)
    w2m = jnp.transpose(params["conv2_w"], (2, 1, 0)).reshape(K * C, C).astype(MATMUL_DTYPE)
    b1r = params["conv1_b"].reshape(1, C).astype(jnp.float32)
    b2r = params["conv2_b"].reshape(1, C).astype(jnp.float32)

    # fc1 weight (64, C*L): torch flatten order (c*L + l) -> kernel order (l*C + c),
    # zero-padded along the contraction dim to a multiple of 128 (numerically exact).
    wf1 = jnp.transpose(params["fc1_w"].reshape(H1, C, L), (2, 1, 0)).reshape(F, H1)
    wf1 = jnp.pad(wf1, ((0, f_pad), (0, 0))).astype(MATMUL_DTYPE)
    bf1 = params["fc1_b"].reshape(1, H1).astype(jnp.float32)
    wf2 = params["fc2_w"].reshape(1, H1).astype(jnp.float32)
    bf2 = params["fc2_b"].reshape(1, 1).astype(jnp.float32)

    kernel = functools.partial(_fused_head_kernel, L=L, C=C, TB=TB, F_PAD=f_pad)

    # VMEM footprint at TB=16 (real model L=86): ~0.2 MB input (double-buffered,
    # bf16) + ~0.4 MB wf1 + ~0.2 MB scratch + intermediates -> well under the
    # scoped-VMEM defaults on v5e/v6e/v7x; no vmem_limit_bytes override needed.
    out_wide = pl.pallas_call(
        kernel,
        out_shape=jax.ShapeDtypeStruct((Bp, 1, OUT_LANES), jnp.float32),
        grid=(G,),
        in_specs=[
            pl.BlockSpec((TB, Lp, C), lambda g: (g, 0, 0)),
            # weight index_maps are constant -> blocks stay resident across steps.
            pl.BlockSpec((K * C, C), lambda g: (0, 0)),
            pl.BlockSpec((1, C), lambda g: (0, 0)),
            pl.BlockSpec((K * C, C), lambda g: (0, 0)),
            pl.BlockSpec((1, C), lambda g: (0, 0)),
            pl.BlockSpec((Fp, H1), lambda g: (0, 0)),
            pl.BlockSpec((1, H1), lambda g: (0, 0)),
            pl.BlockSpec((1, H1), lambda g: (0, 0)),
            pl.BlockSpec((1, 1), lambda g: (0, 0)),
        ],
        out_specs=pl.BlockSpec((TB, 1, OUT_LANES), lambda g: (g, 0, 0)),
        scratch_shapes=[pltpu.VMEM((TB, Lp, C), jnp.float32)],
        compiler_params=pltpu.CompilerParams(dimension_semantics=("parallel",)),
    )(xlp, w1m, b1r, w2m, b2r, wf1, bf1, wf2, bf2)

    return out_wide[:B, 0, :1]                                   # (B, 1)


# ---------------------------------------------------------------------------
# Pure-JAX reference (f32, for correctness check)
# ---------------------------------------------------------------------------
def _reference_forward(latent, params):
    def conv_same(x, w, b):            # x (B,C,L), w (Cout,Cin,K), b (Cout,)
        K = w.shape[-1]
        left = (K - 1) // 2
        xp = jnp.pad(x, ((0, 0), (0, 0), (left, K - 1 - left)))
        L = x.shape[-1]
        y = jnp.zeros((x.shape[0], w.shape[0], L), jnp.float32)
        for k in range(K):
            y = y + jnp.einsum('oi,bil->bol', w[:, :, k], xp[:, :, k:k + L])
        return y + b[None, :, None]

    h = jax.nn.relu(conv_same(latent, params["conv1_w"], params["conv1_b"]))
    h = jax.nn.relu(conv_same(h, params["conv2_w"], params["conv2_b"]))
    pad = POOL_K // 2
    L = h.shape[-1]
    hp = jnp.pad(h, ((0, 0), (0, 0), (pad, pad)), constant_values=-jnp.inf)
    h = jnp.max(jnp.stack([hp[:, :, k:k + L] for k in range(POOL_K)], 0), 0)
    flat = h.reshape(h.shape[0], -1)
    z = jax.nn.relu(flat @ params["fc1_w"].T + params["fc1_b"])
    return z @ params["fc2_w"].T + params["fc2_b"]


# ---------------------------------------------------------------------------
def _init_params(key, base_dim, seq_length):
    ks = jax.random.split(key, 8)
    D = base_dim * seq_length
    return {
        "conv1_w": jax.random.normal(ks[0], (base_dim, base_dim, CONV_K),
                                     jnp.float32) / jnp.sqrt(base_dim * CONV_K),
        "conv1_b": 0.01 * jax.random.normal(ks[1], (base_dim,), jnp.float32),
        "conv2_w": jax.random.normal(ks[2], (base_dim, base_dim, CONV_K),
                                     jnp.float32) / jnp.sqrt(base_dim * CONV_K),
        "conv2_b": 0.01 * jax.random.normal(ks[3], (base_dim,), jnp.float32),
        "fc1_w": jax.random.normal(ks[4], (64, D), jnp.float32) / jnp.sqrt(D),
        "fc1_b": 0.01 * jax.random.normal(ks[5], (64,), jnp.float32),
        "fc2_w": jax.random.normal(ks[6], (1, 64), jnp.float32) / jnp.sqrt(64.0),
        "fc2_b": 0.01 * jax.random.normal(ks[7], (1,), jnp.float32),
    }


if __name__ == "__main__":
    B, BASE_DIM, SEQ_LEN = 2, 32, 16     # small shapes; real model: base_dim x 86
    key = jax.random.PRNGKey(0)
    k_lat, k_par = jax.random.split(key)
    latent = jax.random.normal(k_lat, (B, BASE_DIM, SEQ_LEN), jnp.float32)
    params = _init_params(k_par, BASE_DIM, SEQ_LEN)

    out = jax.block_until_ready(expression_predictor_forward(latent, params))
    ref = jax.block_until_ready(_reference_forward(latent, params))

    assert out.shape == (B, 1), out.shape
    # Tolerance accounts for bf16 matmul operands (f32 accumulation); with
    # MATMUL_DTYPE = jnp.float32 the kernel matches the reference to ~1e-5.
    assert jnp.allclose(out, ref, rtol=5e-2, atol=5e-2), (out, ref)

    print("KERNEL_OK")
</pallas_src>

<mosaic_0001>
module attributes {stable_mosaic.version = 11 : i64} {
  func.func @_fused_head_kernel(%arg0: i32, %arg1: memref<2x23x32xbf16, #tpu.memory_space<vmem>>, %arg2: memref<256x32xbf16, #tpu.memory_space<vmem>>, %arg3: memref<1x32xf32, #tpu.memory_space<vmem>>, %arg4: memref<256x32xbf16, #tpu.memory_space<vmem>>, %arg5: memref<1x32xf32, #tpu.memory_space<vmem>>, %arg6: memref<512x64xbf16, #tpu.memory_space<vmem>>, %arg7: memref<1x64xf32, #tpu.memory_space<vmem>>, %arg8: memref<1x64xf32, #tpu.memory_space<vmem>>, %arg9: memref<1x1xf32, #tpu.memory_space<vmem>>, %arg10: memref<2x1x128xf32, #tpu.memory_space<vmem>>, %arg11: memref<2x23x32xf32, #tpu.memory_space<vmem>>) attributes {dimension_semantics = [#tpu.dimension_semantics<parallel>], iteration_bounds = array<i64: 1>, scalar_prefetch = 0 : i64, scratch_operands = 1 : i64, tpu.core_type = #tpu.core_type<tc>, window_params = [{transform_indices = @transform_0, window_bounds = array<i64: 2, 23, 32>}, {pipeline_mode = #tpu.pipeline_mode<synchronous>, transform_indices = @transform_1, window_bounds = array<i64: 256, 32>}, {pipeline_mode = #tpu.pipeline_mode<synchronous>, transform_indices = @transform_2, window_bounds = array<i64: 1, 32>}, {pipeline_mode = #tpu.pipeline_mode<synchronous>, transform_indices = @transform_3, window_bounds = array<i64: 256, 32>}, {pipeline_mode = #tpu.pipeline_mode<synchronous>, transform_indices = @transform_4, window_bounds = array<i64: 1, 32>}, {pipeline_mode = #tpu.pipeline_mode<synchronous>, transform_indices = @transform_5, window_bounds = array<i64: 512, 64>}, {pipeline_mode = #tpu.pipeline_mode<synchronous>, transform_indices = @transform_6, window_bounds = array<i64: 1, 64>}, {pipeline_mode = #tpu.pipeline_mode<synchronous>, transform_indices = @transform_7, window_bounds = array<i64: 1, 64>}, {pipeline_mode = #tpu.pipeline_mode<synchronous>, transform_indices = @transform_8, window_bounds = array<i64: 1, 1>}, {transform_indices = @transform_9, window_bounds = array<i64: 2, 1, 128>}]} {
    %cst = arith.constant 0.000000e+00 : f32
    %0 = vector.broadcast %cst : f32 to vector<2x3x32xf32>
    %c0 = arith.constant 0 : index
    %c0_0 = arith.constant 0 : index
    %c0_1 = arith.constant 0 : index
    %1 = vector.load %arg11[%c0, %c0_0, %c0_1] : memref<2x23x32xf32, #tpu.memory_space<vmem>>, vector<2x3x32xf32>
    tpu.vector_store %arg11[%c0, %c0_0, %c0_1], %0 {strides = array<i32>} : memref<2x23x32xf32, #tpu.memory_space<vmem>>, vector<2x3x32xf32>,
    %cst_2 = arith.constant 0.000000e+00 : f32
    %2 = vector.broadcast %cst_2 : f32 to vector<2x4x32xf32>
    %c0_3 = arith.constant 0 : index
    %c19 = arith.constant 19 : index
    %c0_4 = arith.constant 0 : index
    %3 = vector.load %arg11[%c0_3, %c19, %c0_4] : memref<2x23x32xf32, #tpu.memory_space<vmem>>, vector<2x4x32xf32>
    tpu.vector_store %arg11[%c0_3, %c19, %c0_4], %2 {strides = array<i32>} : memref<2x23x32xf32, #tpu.memory_space<vmem>>, vector<2x4x32xf32>,
    %c0_5 = arith.constant 0 : index
    %c0_6 = arith.constant 0 : index
    %4 = vector.load %arg3[%c0_5, %c0_6] : memref<1x32xf32, #tpu.memory_space<vmem>>, vector<1x32xf32>
    %c0_7 = arith.constant 0 : index
    %c0_8 = arith.constant 0 : index
    %5 = vector.load %arg5[%c0_7, %c0_8] : memref<1x32xf32, #tpu.memory_space<vmem>>, vector<1x32xf32>
    %c0_9 = arith.constant 0 : index
    %c0_10 = arith.constant 0 : index
    %c0_11 = arith.constant 0 : index
    %6 = vector.load %arg1[%c0_9, %c0_10, %c0_11] : memref<2x23x32xbf16, #tpu.memory_space<vmem>>, vector<2x23x32xbf16>
    %7 = vector.extract_strided_slice %6 {offsets = [0, 0, 0], sizes = [2, 16, 32], strides = [1, 1, 1]} : vector<2x23x32xbf16> to vector<2x16x32xbf16>
    %8 = vector.extract_strided_slice %6 {offsets = [0, 1, 0], sizes = [2, 16, 32], strides = [1, 1, 1]} : vector<2x23x32xbf16> to vector<2x16x32xbf16>
    %9 = vector.extract_strided_slice %6 {offsets = [0, 2, 0], sizes = [2, 16, 32], strides = [1, 1, 1]} : vector<2x23x32xbf16> to vector<2x16x32xbf16>
    %10 = vector.extract_strided_slice %6 {offsets = [0, 3, 0], sizes = [2, 16, 32], strides = [1, 1, 1]} : vector<2x23x32xbf16> to vector<2x16x32xbf16>
    %11 = vector.extract_strided_slice %6 {offsets = [0, 4, 0], sizes = [2, 16, 32], strides = [1, 1, 1]} : vector<2x23x32xbf16> to vector<2x16x32xbf16>
    %12 = vector.extract_strided_slice %6 {offsets = [0, 5, 0], sizes = [2, 16, 32], strides = [1, 1, 1]} : vector<2x23x32xbf16> to vector<2x16x32xbf16>
    %13 = vector.extract_strided_slice %6 {offsets = [0, 6, 0], sizes = [2, 16, 32], strides = [1, 1, 1]} : vector<2x23x32xbf16> to vector<2x16x32xbf16>
    %14 = vector.extract_strided_slice %6 {offsets = [0, 7, 0], sizes = [2, 16, 32], strides = [1, 1, 1]} : vector<2x23x32xbf16> to vector<2x16x32xbf16>
    %15 = tpu.concatenate %7, %8, %9, %10, %11, %12, %13, %14 in 2 : vector<2x16x32xbf16>, vector<2x16x32xbf16>, vector<2x16x32xbf16>, vector<2x16x32xbf16>, vector<2x16x32xbf16>, vector<2x16x32xbf16>, vector<2x16x32xbf16>, vector<2x16x32xbf16> -> vector<2x16x256xbf16>
    %16 = vector.shape_cast %15 : vector<2x16x256xbf16> to vector<32x256xbf16>
    %c0_12 = arith.constant 0 : index
    %c0_13 = arith.constant 0 : index
    %17 = vector.load %arg2[%c0_12, %c0_13] : memref<256x32xbf16, #tpu.memory_space<vmem>>, vector<256x32xbf16>
    %cst_14 = arith.constant dense<0.000000e+00> : vector<32x32xf32>
    %18 = tpu.matmul %16, %17, %cst_14 {dimension_numbers = #tpu.dot_dimension_numbers<[1], [0], [0], [1], [0, 0, 1, 1], [], []>} : vector<32x256xbf16>, vector<256x32xbf16>, vector<32x32xf32> -> vector<32x32xf32>
    %19 = vector.broadcast %4 : vector<1x32xf32> to vector<32x32xf32>
    %20 = arith.addf %18, %19 : vector<32x32xf32>
    %cst_15 = arith.constant 0.000000e+00 : f32
    %21 = vector.broadcast %cst_15 : f32 to vector<32x32xf32>
    %22 = arith.maximumf %20, %21 : vector<32x32xf32>
    %23 = vector.shape_cast %22 : vector<32x32xf32> to vector<2x16x32xf32>
    %c0_16 = arith.constant 0 : index
    %c3 = arith.constant 3 : index
    %c0_17 = arith.constant 0 : index
    %24 = vector.load %arg11[%c0_16, %c3, %c0_17] : memref<2x23x32xf32, #tpu.memory_space<vmem>>, vector<2x16x32xf32>
    tpu.vector_store %arg11[%c0_16, %c3, %c0_17], %23 {strides = array<i32>} : memref<2x23x32xf32, #tpu.memory_space<vmem>>, vector<2x16x32xf32>,
    %c0_18 = arith.constant 0 : index
    %c0_19 = arith.constant 0 : index
    %c0_20 = arith.constant 0 : index
    %25 = vector.load %arg11[%c0_18, %c0_19, %c0_20] : memref<2x23x32xf32, #tpu.memory_space<vmem>>, vector<2x23x32xf32>
    %26 = vector.extract_strided_slice %25 {offsets = [0, 0, 0], sizes = [2, 16, 32], strides = [1, 1, 1]} : vector<2x23x32xf32> to vector<2x16x32xf32>
    %27 = vector.extract_strided_slice %25 {offsets = [0, 1, 0], sizes = [2, 16, 32], strides = [1, 1, 1]} : vector<2x23x32xf32> to vector<2x16x32xf32>
    %28 = vector.extract_strided_slice %25 {offsets = [0, 2, 0], sizes = [2, 16, 32], strides = [1, 1, 1]} : vector<2x23x32xf32> to vector<2x16x32xf32>
    %29 = vector.extract_strided_slice %25 {offsets = [0, 3, 0], sizes = [2, 16, 32], strides = [1, 1, 1]} : vector<2x23x32xf32> to vector<2x16x32xf32>
    %30 = vector.extract_strided_slice %25 {offsets = [0, 4, 0], sizes = [2, 16, 32], strides = [1, 1, 1]} : vector<2x23x32xf32> to vector<2x16x32xf32>
    %31 = vector.extract_strided_slice %25 {offsets = [0, 5, 0], sizes = [2, 16, 32], strides = [1, 1, 1]} : vector<2x23x32xf32> to vector<2x16x32xf32>
    %32 = vector.extract_strided_slice %25 {offsets = [0, 6, 0], sizes = [2, 16, 32], strides = [1, 1, 1]} : vector<2x23x32xf32> to vector<2x16x32xf32>
    %33 = vector.extract_strided_slice %25 {offsets = [0, 7, 0], sizes = [2, 16, 32], strides = [1, 1, 1]} : vector<2x23x32xf32> to vector<2x16x32xf32>
    %34 = tpu.concatenate %26, %27, %28, %29, %30, %31, %32, %33 in 2 : vector<2x16x32xf32>, vector<2x16x32xf32>, vector<2x16x32xf32>, vector<2x16x32xf32>, vector<2x16x32xf32>, vector<2x16x32xf32>, vector<2x16x32xf32>, vector<2x16x32xf32> -> vector<2x16x256xf32>
    %35 = vector.shape_cast %34 : vector<2x16x256xf32> to vector<32x256xf32>
    %36 = arith.truncf %35 : vector<32x256xf32> to vector<32x256xbf16>
    %c0_21 = arith.constant 0 : index
    %c0_22 = arith.constant 0 : index
    %37 = vector.load %arg4[%c0_21, %c0_22] : memref<256x32xbf16, #tpu.memory_space<vmem>>, vector<256x32xbf16>
    %cst_23 = arith.constant dense<0.000000e+00> : vector<32x32xf32>
    %38 = tpu.matmul %36, %37, %cst_23 {dimension_numbers = #tpu.dot_dimension_numbers<[1], [0], [0], [1], [0, 0, 1, 1], [], []>} : vector<32x256xbf16>, vector<256x32xbf16>, vector<32x32xf32> -> vector<32x32xf32>
    %39 = vector.broadcast %5 : vector<1x32xf32> to vector<32x32xf32>
    %40 = arith.addf %38, %39 : vector<32x32xf32>
    %cst_24 = arith.constant 0.000000e+00 : f32
    %41 = vector.broadcast %cst_24 : f32 to vector<32x32xf32>
    %42 = arith.maximumf %40, %41 : vector<32x32xf32>
    %43 = vector.shape_cast %42 : vector<32x32xf32> to vector<2x16x32xf32>
    %c0_25 = arith.constant 0 : index
    %c3_26 = arith.constant 3 : index
    %c0_27 = arith.constant 0 : index
    %44 = vector.load %arg11[%c0_25, %c3_26, %c0_27] : memref<2x23x32xf32, #tpu.memory_space<vmem>>, vector<2x16x32xf32>
    tpu.vector_store %arg11[%c0_25, %c3_26, %c0_27], %43 {strides = array<i32>} : memref<2x23x32xf32, #tpu.memory_space<vmem>>, vector<2x16x32xf32>,
    %c0_28 = arith.constant 0 : index
    %c0_29 = arith.constant 0 : index
    %c0_30 = arith.constant 0 : index
    %45 = vector.load %arg11[%c0_28, %c0_29, %c0_30] : memref<2x23x32xf32, #tpu.memory_space<vmem>>, vector<2x22x32xf32>
    %46 = vector.extract_strided_slice %45 {offsets = [0, 0, 0], sizes = [2, 21, 32], strides = [1, 1, 1]} : vector<2x22x32xf32> to vector<2x21x32xf32>
    %47 = vector.extract_strided_slice %45 {offsets = [0, 1, 0], sizes = [2, 21, 32], strides = [1, 1, 1]} : vector<2x22x32xf32> to vector<2x21x32xf32>
    %48 = arith.maximumf %46, %47 : vector<2x21x32xf32>
    %49 = vector.extract_strided_slice %48 {offsets = [0, 0, 0], sizes = [2, 19, 32], strides = [1, 1, 1]} : vector<2x21x32xf32> to vector<2x19x32xf32>
    %50 = vector.extract_strided_slice %48 {offsets = [0, 2, 0], sizes = [2, 19, 32], strides = [1, 1, 1]} : vector<2x21x32xf32> to vector<2x19x32xf32>
    %51 = arith.maximumf %49, %50 : vector<2x19x32xf32>
    %52 = vector.extract_strided_slice %51 {offsets = [0, 0, 0], sizes = [2, 16, 32], strides = [1, 1, 1]} : vector<2x19x32xf32> to vector<2x16x32xf32>
    %53 = vector.extract_strided_slice %51 {offsets = [0, 3, 0], sizes = [2, 16, 32], strides = [1, 1, 1]} : vector<2x19x32xf32> to vector<2x16x32xf32>
    %54 = arith.maximumf %52, %53 : vector<2x16x32xf32>
    %55 = vector.shape_cast %54 : vector<2x16x32xf32> to vector<2x512xf32>
    %56 = arith.truncf %55 : vector<2x512xf32> to vector<2x512xbf16>
    %c0_31 = arith.constant 0 : index
    %c0_32 = arith.constant 0 : index
    %57 = vector.load %arg6[%c0_31, %c0_32] : memref<512x64xbf16, #tpu.memory_space<vmem>>, vector<512x64xbf16>
    %cst_33 = arith.constant dense<0.000000e+00> : vector<2x64xf32>
    %58 = tpu.matmul %56, %57, %cst_33 {dimension_numbers = #tpu.dot_dimension_numbers<[1], [0], [0], [1], [0, 0, 1, 1], [], []>} : vector<2x512xbf16>, vector<512x64xbf16>, vector<2x64xf32> -> vector<2x64xf32>
    %c0_34 = arith.constant 0 : index
    %c0_35 = arith.constant 0 : index
    %59 = vector.load %arg7[%c0_34, %c0_35] : memref<1x64xf32, #tpu.memory_space<vmem>>, vector<1x64xf32>
    %60 = vector.broadcast %59 : vector<1x64xf32> to vector<2x64xf32>
    %61 = arith.addf %58, %60 : vector<2x64xf32>
    %cst_36 = arith.constant 0.000000e+00 : f32
    %62 = vector.broadcast %cst_36 : f32 to vector<2x64xf32>
    %63 = arith.maximumf %61, %62 : vector<2x64xf32>
    %c0_37 = arith.constant 0 : index
    %c0_38 = arith.constant 0 : index
    %64 = vector.load %arg8[%c0_37, %c0_38] : memref<1x64xf32, #tpu.memory_space<vmem>>, vector<1x64xf32>
    %65 = vector.broadcast %64 : vector<1x64xf32> to vector<2x64xf32>
    %66 = arith.mulf %63, %65 : vector<2x64xf32>
    %cst_39 = arith.constant dense<0.000000e+00> : vector<2xf32>
    %67 = vector.multi_reduction <add>, %66, %cst_39 [1] : vector<2x64xf32> to vector<2xf32>
    %68 = vector.shape_cast %67 : vector<2xf32> to vector<2x1xf32>
    %c0_40 = arith.constant 0 : index
    %c0_41 = arith.constant 0 : index
    %69 = vector.load %arg9[%c0_40, %c0_41] : memref<1x1xf32, #tpu.memory_space<vmem>>, vector<1x1xf32>
    %70 = vector.broadcast %69 : vector<1x1xf32> to vector<2x1xf32>
    %71 = arith.addf %68, %70 : vector<2x1xf32>
    %72 = vector.shape_cast %71 : vector<2x1xf32> to vector<2x1xf32>
    %73 = vector.broadcast %72 : vector<2x1xf32> to vector<2x128xf32>
    %c0_42 = arith.constant 0 : index
    %c0_43 = arith.constant 0 : index
    %c0_44 = arith.constant 0 : index
    %74 = vector.load %arg10[%c0_42, %c0_43, %c0_44] : memref<2x1x128xf32, #tpu.memory_space<vmem>>, vector<2x1x128xf32>
    %75 = vector.shape_cast %74 : vector<2x1x128xf32> to vector<2x128xf32>
    %76 = vector.shape_cast %73 : vector<2x128xf32> to vector<2x1x128xf32>
    tpu.vector_store %arg10[%c0_42, %c0_43, %c0_44], %76 {strides = array<i32>} : memref<2x1x128xf32, #tpu.memory_space<vmem>>, vector<2x1x128xf32>,
    return
  }
  func.func @transform_0(%arg0: i32) -> (i32, i32, i32) {
    %c0_i32 = arith.constant 0 : i32
    %c0_i32_0 = arith.constant 0 : i32
    %c0_i32_1 = arith.constant 0 : i32
    return %arg0, %c0_i32, %c0_i32_0 : i32, i32, i32
  }
  func.func @transform_1(%arg0: i32) -> (i32, i32) {
    %c0_i32 = arith.constant 0 : i32
    %c0_i32_0 = arith.constant 0 : i32
    %c0_i32_1 = arith.constant 0 : i32
    return %c0_i32, %c0_i32_0 : i32, i32
  }
  func.func @transform_2(%arg0: i32) -> (i32, i32) {
    %c0_i32 = arith.constant 0 : i32
    %c0_i32_0 = arith.constant 0 : i32
    %c0_i32_1 = arith.constant 0 : i32
    return %c0_i32, %c0_i32_0 : i32, i32
  }
  func.func @transform_3(%arg0: i32) -> (i32, i32) {
    %c0_i32 = arith.constant 0 : i32
    %c0_i32_0 = arith.constant 0 : i32
    %c0_i32_1 = arith.constant 0 : i32
    return %c0_i32, %c0_i32_0 : i32, i32
  }
  func.func @transform_4(%arg0: i32) -> (i32, i32) {
    %c0_i32 = arith.constant 0 : i32
    %c0_i32_0 = arith.constant 0 : i32
    %c0_i32_1 = arith.constant 0 : i32
    return %c0_i32, %c0_i32_0 : i32, i32
  }
  func.func @transform_5(%arg0: i32) -> (i32, i32) {
    %c0_i32 = arith.constant 0 : i32
    %c0_i32_0 = arith.constant 0 : i32
    %c0_i32_1 = arith.constant 0 : i32
    return %c0_i32, %c0_i32_0 : i32, i32
  }
  func.func @transform_6(%arg0: i32) -> (i32, i32) {
    %c0_i32 = arith.constant 0 : i32
    %c0_i32_0 = arith.constant 0 : i32
    %c0_i32_1 = arith.constant 0 : i32
    return %c0_i32, %c0_i32_0 : i32, i32
  }
  func.func @transform_7(%arg0: i32) -> (i32, i32) {
    %c0_i32 = arith.constant 0 : i32
    %c0_i32_0 = arith.constant 0 : i32
    %c0_i32_1 = arith.constant 0 : i32
    return %c0_i32, %c0_i32_0 : i32, i32
  }
  func.func @transform_8(%arg0: i32) -> (i32, i32) {
    %c0_i32 = arith.constant 0 : i32
    %c0_i32_0 = arith.constant 0 : i32
    %c0_i32_1 = arith.constant 0 : i32
    return %c0_i32, %c0_i32_0 : i32, i32
  }
  func.func @transform_9(%arg0: i32) -> (i32, i32, i32) {
    %c0_i32 = arith.constant 0 : i32
    %c0_i32_0 = arith.constant 0 : i32
    %c0_i32_1 = arith.constant 0 : i32
    return %arg0, %c0_i32, %c0_i32_0 : i32, i32, i32
  }
}

</mosaic_0001>

<llo_original>
// kernel: expression_predictor_forward.1
$region0: #{expression_predictor_forward.1}
  #allocation0 [shape = 'u32[]', space=smem, size = 0x4, offset = 0x4, fixed_abs, tag = 'smem constant byte address 0x4 - core index']
  #allocation1 [shape = 'u32[144,128]{1,0:T(1,128)}', space=vmem, size = 0x12000, scoped, tag = 'internal scratch']
  #allocation2 [shape = 'f32[2,23,32]{2,1,0:T(8,128)}', space=vmem, size = 0x6000, scoped, tag = 'scratch operand']
  #allocation3 [shape = 'f32[1,1]{1,0:T(1,128)S(1)}', space=vmem, size = 0x200, scoped, tag = 'scoped memory for expression_predictor_forward.1']
  %s0 = inlined_call_operand.vmem [shape: bf16[2,23,32], index: 0, kind: input, shape index: {}]
  %s1 = inlined_call_operand.vmem [shape: bf16[256,32], index: 1, kind: input, shape index: {}]
  %s2 = inlined_call_operand.vmem [shape: f32[1,32], index: 2, kind: input, shape index: {}]
  %s3 = inlined_call_operand.vmem [shape: bf16[256,32], index: 3, kind: input, shape index: {}]
  %s4 = inlined_call_operand.vmem [shape: f32[1,32], index: 4, kind: input, shape index: {}]
  %s5 = inlined_call_operand.vmem [shape: bf16[512,64], index: 5, kind: input, shape index: {}]
  %s6 = inlined_call_operand.vmem [shape: f32[1,64], index: 6, kind: input, shape index: {}]
  %s7 = inlined_call_operand.vmem [shape: f32[1,64], index: 7, kind: input, shape index: {}]
  %s8 = inlined_call_operand.<no memory space> [shape: f32[1,1], index: 8, kind: input, shape index: {}]
  %s9 = inlined_call_operand.vmem [shape: f32[2,1,128], index: 9, kind: output, shape index: {}]
  %s10 = sld [smem:[#allocation0]]
  $region46: #{expression_predictor_forward.1} parent=0
    _
  %s12 = ssub.s32 1, %s10
  %s13 = scalar_select 0, %s12, %s10
  %v14 = vstv %s8
  %15 = vst [vmem:[#allocation3] sm:$0x1] %v14
  // Predicated region
  $region2: #{expression_predictor_forward.1} parent=0 // pred_check
    _
  $region3: #{expression_predictor_forward.1} parent=0 // pred_check_branch
    %17 = sbr.rel (0) target = $region5
  $region4: #{expression_predictor_forward.1} parent=0 // pred_region
    _
  $region5: #{expression_predictor_forward.1} parent=0 // pred_fallthru
    _
  // Predicated region
  $region6: #{expression_predictor_forward.1} parent=0 // pred_check
    _
  $region7: #{expression_predictor_forward.1} parent=0 // pred_check_branch
    %19 = sbr.rel (0) target = $region9
  $region8: #{expression_predictor_forward.1} parent=0 // pred_region
    _
  $region9: #{expression_predictor_forward.1} parent=0 // pred_fallthru
    _
  // Predicated region
  $region10: #{expression_predictor_forward.1} parent=0 // pred_check
    _
  $region11: #{expression_predictor_forward.1} parent=0 // pred_check_branch
    %21 = sbr.rel (0) target = $region13
  $region12: #{expression_predictor_forward.1} parent=0 // pred_region
    _
  $region13: #{expression_predictor_forward.1} parent=0 // pred_fallthru
    _
  // Predicated region
  $region14: #{expression_predictor_forward.1} parent=0 // pred_check
    _
  $region15: #{expression_predictor_forward.1} parent=0 // pred_check_branch
    %23 = sbr.rel (0) target = $region17
  $region16: #{expression_predictor_forward.1} parent=0 // pred_region
    _
  $region17: #{expression_predictor_forward.1} parent=0 // pred_fallthru
    _
  // Predicated region
  $region18: #{expression_predictor_forward.1} parent=0 // pred_check
    _
  $region19: #{expression_predictor_forward.1} parent=0 // pred_check_branch
    %25 = sbr.rel (0) target = $region21
  $region20: #{expression_predictor_forward.1} parent=0 // pred_region
    _
  $region21: #{expression_predictor_forward.1} parent=0 // pred_fallthru
    _
  // Predicated region
  $region22: #{expression_predictor_forward.1} parent=0 // pred_check
    _
  $region23: #{expression_predictor_forward.1} parent=0 // pred_check_branch
    %27 = sbr.rel (0) target = $region25
  $region24: #{expression_predictor_forward.1} parent=0 // pred_region
    _
  $region25: #{expression_predictor_forward.1} parent=0 // pred_fallthru
    _
  // Predicated region
  $region26: #{expression_predictor_forward.1} parent=0 // pred_check
    _
  $region27: #{expression_predictor_forward.1} parent=0 // pred_check_branch
    %29 = sbr.rel (0) target = $region29
  $region28: #{expression_predictor_forward.1} parent=0 // pred_region
    _
  $region29: #{expression_predictor_forward.1} parent=0 // pred_fallthru
    _
  // Predicated region
  $region30: #{expression_predictor_forward.1} parent=0 // pred_check
    _
  $region31: #{expression_predictor_forward.1} parent=0 // pred_check_branch
    %31 = sbr.rel (0) target = $region33
  $region32: #{expression_predictor_forward.1} parent=0 // pred_region
    _
  $region33: #{expression_predictor_forward.1} parent=0 // pred_fallthru
    _
  // Predicated region
  $region34: #{expression_predictor_forward.1} parent=0 // pred_check
    _
  $region35: #{expression_predictor_forward.1} parent=0 // pred_check_branch
    %33 = sbr.rel (0) target = $region37
  $region36: #{expression_predictor_forward.1} parent=0 // pred_region
    _
  $region37: #{expression_predictor_forward.1} parent=0 // pred_fallthru
    _
  %vm35 = vcmask 256000
  %36 = vst.msk [vmem:[#allocation2] sm:$0x7] %vm35, 0.0
  %37 = vst.msk [vmem:[#allocation2 + $0x18] sm:$0x7] %vm35, 0.0
  %vm38 = vcmask 257024
  %39 = vst.msk [vmem:[#allocation2 + $0x13] sm:$0xf] %vm38, 0.0
  %40 = vst.msk [vmem:[#allocation2 + $0x2b] sm:$0xf] %vm38, 0.0
  %v41 = vld [vmem:[%s2] sm:$0x1]
  %v42 = vld [vmem:[%s4] sm:$0x1]
  %v43 = vld [vmem:[%s0] sm:$0xf]
  %v44 = vld [vmem:[%s0 + $0x4] sm:$0xf]
  %v45 = vld [vmem:[%s0 + $0x8] sm:$0xf]
  %v46 = vld [vmem:[%s0 + $0xc] sm:$0xf]
  %v47 = vld [vmem:[%s0 + $0x10] sm:$0xf]
  %v48 = vld [vmem:[%s0 + $0x14] sm:$0xf]
  %v53 = vunpack.c.l.b16 %v43
  %v54 = vunpack.c.l.b16 %v44
  %v55 = vunpack.c.l.b16 %v46
  %v56 = vunpack.c.l.b16 %v47
  %v57 = vpack.c.b16 %v54, %v53
  %v58 = vpack.c.b16 %v56, %v55
  %v61 = vunpack.c.l.b16 %v45
  %v62 = vunpack.c.l.b16 %v48
  %v63 = vpack.c.b16 %v61, %v61
  %v64 = vpack.c.b16 %v62, %v62
  %vm65 = vsmask.f32 7424
  %v67 = vshrl.u32 %v57, 16
  %v69 = vshll.u32 %v57, 16
  %v71 = vrot.slane %v69, 1
  %v72 = vor.u32 %v67, %v71
  %v74 = vshll.u32 %v63, 16
  %v76 = vrot.slane %v74, 1
  %v77 = vsel %vm65, %v72, %v76
  %v79 = vshrl.u32 %v58, 16
  %v81 = vshll.u32 %v58, 16
  %v83 = vrot.slane %v81, 1
  %v84 = vor.u32 %v79, %v83
  %v86 = vshll.u32 %v64, 16
  %v88 = vrot.slane %v86, 1
  %v89 = vsel %vm65, %v84, %v88
  %90 = vrot.lane.b32.xlu0 %v77, 32
  %v91 = vpop.permute.xlu0 %90
  %92 = vrot.lane.b32.xlu0 %v89, 32
  %v93 = vpop.permute.xlu0 %92
  %vm94 = vcmask 1046528
  %v95 = vrot.slane %v57, 1
  %v96 = vrot.slane %v63, 1
  %v97 = vsel %vm94, %v95, %v96
  %v98 = vrot.slane %v58, 1
  %v99 = vrot.slane %v64, 1
  %v100 = vsel %vm94, %v98, %v99
  %101 = vrot.lane.b32.xlu0 %v97, 64
  %v102 = vpop.permute.xlu0 %101
  %103 = vrot.lane.b32.xlu0 %v100, 64
  %v104 = vpop.permute.xlu0 %103
  %vm105 = vsmask.f32 6400
  %v106 = vrot.slane %v67, 1
  %v107 = vrot.slane %v69, 2
  %v108 = vor.u32 %v106, %v107
  %v109 = vshrl.u32 %v63, 16
  %v111 = vrot.slane %v109, 1
  %v112 = vrot.slane %v74, 2
  %v113 = vor.u32 %v111, %v112
  %v114 = vsel %vm105, %v108, %v113
  %v115 = vrot.slane %v79, 1
  %v116 = vrot.slane %v81, 2
  %v117 = vor.u32 %v115, %v116
  %v118 = vshrl.u32 %v64, 16
  %v120 = vrot.slane %v118, 1
  %v121 = vrot.slane %v86, 2
  %v122 = vor.u32 %v120, %v121
  %v123 = vsel %vm105, %v117, %v122
  %124 = vrot.lane.b32.xlu0 %v114, 96
  %v125 = vpop.permute.xlu0 %124
  %126 = vrot.lane.b32.xlu0 %v123, 96
  %v127 = vpop.permute.xlu0 %126
  %vm128 = vcmask 1045504
  %v129 = vrot.slane %v57, 2
  %v130 = vrot.slane %v63, 2
  %v131 = vsel %vm128, %v129, %v130
  %v132 = vrot.slane %v58, 2
  %v133 = vrot.slane %v64, 2
  %v134 = vsel %vm128, %v132, %v133
  %vm135 = vsmask.f32 5376
  %v136 = vrot.slane %v67, 2
  %v137 = vrot.slane %v69, 3
  %v138 = vor.u32 %v136, %v137
  %v139 = vrot.slane %v109, 2
  %v140 = vrot.slane %v74, 3
  %v141 = vor.u32 %v139, %v140
  %v142 = vsel %vm135, %v138, %v141
  %v143 = vrot.slane %v79, 2
  %v144 = vrot.slane %v81, 3
  %v145 = vor.u32 %v143, %v144
  %v146 = vrot.slane %v118, 2
  %v147 = vrot.slane %v86, 3
  %v148 = vor.u32 %v146, %v147
  %v149 = vsel %vm135, %v145, %v148
  %150 = vrot.lane.b32.xlu0 %v142, 32
  %v151 = vpop.permute.xlu0 %150
  %152 = vrot.lane.b32.xlu0 %v149, 32
  %v153 = vpop.permute.xlu0 %152
  %vm154 = vcmask 1044480
  %v155 = vrot.slane %v57, 3
  %v156 = vrot.slane %v63, 3
  %v157 = vsel %vm154, %v155, %v156
  %v158 = vrot.slane %v58, 3
  %v159 = vrot.slane %v64, 3
  %v160 = vsel %vm154, %v158, %v159
  %161 = vrot.lane.b32.xlu0 %v157, 64
  %v162 = vpop.permute.xlu0 %161
  %163 = vrot.lane.b32.xlu0 %v160, 64
  %v164 = vpop.permute.xlu0 %163
  %vm165 = vsmask.f32 4352
  %v166 = vrot.slane %v67, 3
  %v167 = vrot.slane %v69, 4
  %v168 = vor.u32 %v166, %v167
  %v169 = vrot.slane %v109, 3
  %v170 = vrot.slane %v74, 4
  %v171 = vor.u32 %v169, %v170
  %v172 = vsel %vm165, %v168, %v171
  %v173 = vrot.slane %v79, 3
  %v174 = vrot.slane %v81, 4
  %v175 = vor.u32 %v173, %v174
  %v176 = vrot.slane %v118, 3
  %v177 = vrot.slane %v86, 4
  %v178 = vor.u32 %v176, %v177
  %v179 = vsel %vm165, %v175, %v178
  %180 = vrot.lane.b32.xlu0 %v172, 96
  %v181 = vpop.permute.xlu0 %180
  %182 = vrot.lane.b32.xlu0 %v179, 96
  %v183 = vpop.permute.xlu0 %182
  %vm184 = vcmask 261120
  %v186 = vsel %vm184, %v57, %v91
  %v188 = vsel %vm184, %v58, %v93
  %vm189 = vcmask 523264
  %v191 = vsel %vm189, %v186, %v102
  %v193 = vsel %vm189, %v188, %v104
  %vm194 = vcmask 785408
  %v196 = vsel %vm194, %v191, %v125
  %v199 = vsel %vm194, %v193, %v127
  %v203 = vsel %vm184, %v131, %v151
  %v206 = vsel %vm184, %v134, %v153
  %v208 = vsel %vm189, %v203, %v162
  %v210 = vsel %vm189, %v206, %v164
  %v212 = vsel %vm194, %v208, %v181
  %v215 = vsel %vm194, %v210, %v183
  %v217 = vld [vmem:[%s1] sm:$0xf]
  %v218 = vld [vmem:[%s1 + $0x4] sm:$0xf]
  %v219 = vld [vmem:[%s1 + $0x8] sm:$0xf]
  %v220 = vld [vmem:[%s1 + $0xc] sm:$0xf]
  %v221 = vld [vmem:[%s1 + $0x10] sm:$0xf]
  %v222 = vld [vmem:[%s1 + $0x14] sm:$0xf]
  %v223 = vld [vmem:[%s1 + $0x18] sm:$0xf]
  %v224 = vld [vmem:[%s1 + $0x1c] sm:$0xf]
  %v225 = vld [vmem:[%s1 + $0x20] sm:$0xf]
  %v226 = vld [vmem:[%s1 + $0x24] sm:$0xf]
  %v227 = vld [vmem:[%s1 + $0x28] sm:$0xf]
  %v228 = vld [vmem:[%s1 + $0x2c] sm:$0xf]
  %v229 = vld [vmem:[%s1 + $0x30] sm:$0xf]
  %v230 = vld [vmem:[%s1 + $0x34] sm:$0xf]
  %v231 = vld [vmem:[%s1 + $0x38] sm:$0xf]
  %v232 = vld [vmem:[%s1 + $0x3c] sm:$0xf]
  %v233 = vld [vmem:[%s1 + $0x40] sm:$0xf]
  %v234 = vld [vmem:[%s1 + $0x44] sm:$0xf]
  %v235 = vld [vmem:[%s1 + $0x48] sm:$0xf]
  %v236 = vld [vmem:[%s1 + $0x4c] sm:$0xf]
  %v237 = vld [vmem:[%s1 + $0x50] sm:$0xf]
  %v238 = vld [vmem:[%s1 + $0x54] sm:$0xf]
  %v239 = vld [vmem:[%s1 + $0x58] sm:$0xf]
  %v240 = vld [vmem:[%s1 + $0x5c] sm:$0xf]
  %v241 = vld [vmem:[%s1 + $0x60] sm:$0xf]
  %v242 = vld [vmem:[%s1 + $0x64] sm:$0xf]
  %v243 = vld [vmem:[%s1 + $0x68] sm:$0xf]
  %v244 = vld [vmem:[%s1 + $0x6c] sm:$0xf]
  %v245 = vld [vmem:[%s1 + $0x70] sm:$0xf]
  %v246 = vld [vmem:[%s1 + $0x74] sm:$0xf]
  %v247 = vld [vmem:[%s1 + $0x78] sm:$0xf]
  %v248 = vld [vmem:[%s1 + $0x7c] sm:$0xf]
  %v250 = vlaneseq
  %v251 = vshrl.u32 %v250, 7
  %v252 = vsub.s32 0, %v251
  %v253 = vrot.slane %v41, %v252
  %v287 = vunpack.c.l.b16 %v217
  %v288 = vunpack.c.l.b16 %v218
  %v289 = vunpack.c.l.b16 %v219
  %v290 = vunpack.c.l.b16 %v220
  %v291 = vunpack.c.l.b16 %v221
  %v292 = vunpack.c.l.b16 %v222
  %v293 = vunpack.c.l.b16 %v223
  %v294 = vunpack.c.l.b16 %v224
  %v295 = vunpack.c.l.b16 %v225
  %v296 = vunpack.c.l.b16 %v226
  %v297 = vunpack.c.l.b16 %v227
  %v298 = vunpack.c.l.b16 %v228
  %v299 = vunpack.c.l.b16 %v229
  %v300 = vunpack.c.l.b16 %v230
  %v301 = vunpack.c.l.b16 %v231
  %v302 = vunpack.c.l.b16 %v232
  %v303 = vunpack.c.l.b16 %v233
  %v304 = vunpack.c.l.b16 %v234
  %v305 = vunpack.c.l.b16 %v235
  %v306 = vunpack.c.l.b16 %v236
  %v307 = vunpack.c.l.b16 %v237
  %v308 = vunpack.c.l.b16 %v238
  %v309 = vunpack.c.l.b16 %v239
  %v310 = vunpack.c.l.b16 %v240
  %v311 = vunpack.c.l.b16 %v241
  %v312 = vunpack.c.l.b16 %v242
  %v313 = vunpack.c.l.b16 %v243
  %v314 = vunpack.c.l.b16 %v244
  %v315 = vunpack.c.l.b16 %v245
  %v316 = vunpack.c.l.b16 %v246
  %v317 = vunpack.c.l.b16 %v247
  %v318 = vunpack.c.l.b16 %v248
  %v319 = vpack.c.b16 %v288, %v287
  %v320 = vpack.c.b16 %v290, %v289
  %v321 = vpack.c.b16 %v292, %v291
  %v322 = vpack.c.b16 %v294, %v293
  %v323 = vpack.c.b16 %v296, %v295
  %v324 = vpack.c.b16 %v298, %v297
  %v325 = vpack.c.b16 %v300, %v299
  %v326 = vpack.c.b16 %v302, %v301
  %v327 = vpack.c.b16 %v304, %v303
  %v328 = vpack.c.b16 %v306, %v305
  %v329 = vpack.c.b16 %v308, %v307
  %v330 = vpack.c.b16 %v310, %v309
  %v331 = vpack.c.b16 %v312, %v311
  %v332 = vpack.c.b16 %v314, %v313
  %v333 = vpack.c.b16 %v316, %v315
  %v334 = vpack.c.b16 %v318, %v317
  %351 = vmatprep.subr.bf16.mxu0 0
  %352 = vmatpush1.bf16.msra.mxu0 %v319
  %353 = vmatprep.subr.bf16.mxu0 0
  %354 = vmatpush1.bf16.msra.mxu0 %v320
  %355 = vmatprep.subr.bf16.mxu0 0
  %356 = vmatpush1.bf16.msra.mxu0 %v321
  %357 = vmatprep.subr.bf16.mxu0 0
  %358 = vmatpush1.bf16.msra.mxu0 %v322
  %359 = vmatprep.subr.bf16.mxu0 0
  %360 = vmatpush1.bf16.msra.mxu0 %v323
  %361 = vmatprep.subr.bf16.mxu0 0
  %362 = vmatpush1.bf16.msra.mxu0 %v324
  %363 = vmatprep.subr.bf16.mxu0 0
  %364 = vmatpush1.bf16.msra.mxu0 %v325
  %365 = vmatprep.subr.bf16.mxu0 0
  %366 = vmatpush1.bf16.msra.mxu0 %v326
  %367 = vmatprep.subr.bf16.mxu0 0
  %368 = vmatpush1.bf16.msra.mxu0 %v327
  %369 = vmatprep.subr.bf16.mxu0 0
  %370 = vmatpush1.bf16.msra.mxu0 %v328
  %371 = vmatprep.subr.bf16.mxu0 0
  %372 = vmatpush1.bf16.msra.mxu0 %v329
  %373 = vmatprep.subr.bf16.mxu0 0
  %374 = vmatpush1.bf16.msra.mxu0 %v330
  %375 = vmatprep.subr.bf16.mxu0 0
  %376 = vmatpush1.bf16.msra.mxu0 %v331
  %377 = vmatprep.subr.bf16.mxu0 0
  %378 = vmatpush1.bf16.msra.mxu0 %v332
  %379 = vmatprep.subr.bf16.mxu0 0
  %380 = vmatpush1.bf16.msra.mxu0 %v333
  %381 = vmatprep.subr.bf16.mxu0 0
  %382 = vmatpush1.bf16.msra.mxu0 %v334
  %383 = vmatprep.mubr.bf16.mxu0 %v212
  %384 = vmatmul.mubr.bf16.gmra.mrb[0].mxu0 %v196
  %v385 = vpop.f32.mrb[0].mxu0
  %v386 = vadd.f32 %v253, %v385
  %v387 = vpop.f32.mrb[0].mxu0
  %v388 = vpop.f32.mrb[0].mxu0
  %v389 = vadd.f32 %v253, %v388
  %v390 = vpop.f32.mrb[0].mxu0
  %391 = vmatprep.mubr.bf16.mxu0 %v215
  %392 = vmatmul.mubr.bf16.gmra.mrb[0].mxu0 %v199
  %v393 = vpop.f32.mrb[0].mxu0
  %v394 = vadd.f32 %v253, %v393
  %v395 = vpop.f32.mrb[0].mxu0
  %v396 = vpop.f32.mrb[0].mxu0
  %v397 = vadd.f32 %v253, %v396
  %v398 = vpop.f32.mrb[0].mxu0
  %399 = vdwg.mxu0
  %v400 = vmax.f32 %v386, 0.0
  %v401 = vmax.f32 %v389, 0.0
  %v402 = vmax.f32 %v394, 0.0
  %v403 = vmax.f32 %v397, 0.0
  %404 = vst.msk [vmem:[#allocation2 + $0x3] sm:$0xff] %vm184, %v400
  %405 = vst.msk [vmem:[#allocation2 + $0xb] sm:$0xff] %vm184, %v401
  %406 = vst.msk [vmem:[#allocation2 + $0x1b] sm:$0xff] %vm184, %v402
  %407 = vst.msk [vmem:[#allocation2 + $0x23] sm:$0xff] %vm184, %v403
  %v408 = vld [vmem:[#allocation2] sm:$0xff]
  %v409 = vld [vmem:[#allocation2 + $0x8] sm:$0xff]
  %v410 = vld [vmem:[#allocation2 + $0x10] sm:$0x7f]
  %v411 = vld [vmem:[#allocation2 + $0x18] sm:$0xff]
  %v412 = vld [vmem:[#allocation2 + $0x20] sm:$0xff]
  %v413 = vld [vmem:[#allocation2 + $0x28] sm:$0x7f]
  %vm420 = vcmask 1046528
  %v421 = vrot.slane %v408, 1
  %v422 = vrot.slane %v409, 1
  %v423 = vsel %vm420, %v421, %v422
  %v424 = vrot.slane %v410, 1
  %v425 = vsel %vm420, %v422, %v424
  %v426 = vrot.slane %v411, 1
  %v427 = vrot.slane %v412, 1
  %v428 = vsel %vm420, %v426, %v427
  %v429 = vrot.slane %v413, 1
  %v430 = vsel %vm420, %v427, %v429
  %431 = vrot.lane.b32.xlu0 %v423, 32
  %v432 = vpop.permute.xlu0 %431
  %433 = vrot.lane.b32.xlu0 %v425, 32
  %v434 = vpop.permute.xlu0 %433
  %435 = vrot.lane.b32.xlu0 %v428, 32
  %v436 = vpop.permute.xlu0 %435
  %437 = vrot.lane.b32.xlu0 %v430, 32
  %v438 = vpop.permute.xlu0 %437
  %vm443 = vcmask 1045504
  %v444 = vrot.slane %v408, 2
  %v445 = vrot.slane %v409, 2
  %v446 = vsel %vm443, %v444, %v445
  %v447 = vrot.slane %v410, 2
  %v448 = vsel %vm443, %v445, %v447
  %v449 = vrot.slane %v411, 2
  %v450 = vrot.slane %v412, 2
  %v451 = vsel %vm443, %v449, %v450
  %v452 = vrot.slane %v413, 2
  %v453 = vsel %vm443, %v450, %v452
  %454 = vrot.lane.b32.xlu0 %v446, 64
  %v455 = vpop.permute.xlu0 %454
  %456 = vrot.lane.b32.xlu0 %v448, 64
  %v457 = vpop.permute.xlu0 %456
  %458 = vrot.lane.b32.xlu0 %v451, 64
  %v459 = vpop.permute.xlu0 %458
  %460 = vrot.lane.b32.xlu0 %v453, 64
  %v461 = vpop.permute.xlu0 %460
  %vm466 = vcmask 1044480
  %v467 = vrot.slane %v408, 3
  %v468 = vrot.slane %v409, 3
  %v469 = vsel %vm466, %v467, %v468
  %v470 = vrot.slane %v410, 3
  %v471 = vsel %vm466, %v468, %v470
  %v472 = vrot.slane %v411, 3
  %v473 = vrot.slane %v412, 3
  %v474 = vsel %vm466, %v472, %v473
  %v475 = vrot.slane %v413, 3
  %v476 = vsel %vm466, %v473, %v475
  %477 = vrot.lane.b32.xlu0 %v469, 96
  %v478 = vpop.permute.xlu0 %477
  %479 = vrot.lane.b32.xlu0 %v471, 96
  %v480 = vpop.permute.xlu0 %479
  %481 = vrot.lane.b32.xlu0 %v474, 96
  %v482 = vpop.permute.xlu0 %481
  %483 = vrot.lane.b32.xlu0 %v476, 96
  %v484 = vpop.permute.xlu0 %483
  %vm489 = vcmask 1043456
  %v490 = vrot.slane %v408, 4
  %v491 = vrot.slane %v409, 4
  %v492 = vsel %vm489, %v490, %v491
  %v493 = vrot.slane %v410, 4
  %v494 = vsel %vm489, %v491, %v493
  %v495 = vrot.slane %v411, 4
  %v496 = vrot.slane %v412, 4
  %v497 = vsel %vm489, %v495, %v496
  %v498 = vrot.slane %v413, 4
  %v499 = vsel %vm489, %v496, %v498
  %vm504 = vcmask 1042432
  %v505 = vrot.slane %v408, 5
  %v506 = vrot.slane %v409, 5
  %v507 = vsel %vm504, %v505, %v506
  %v508 = vrot.slane %v410, 5
  %v509 = vsel %vm504, %v506, %v508
  %v510 = vrot.slane %v411, 5
  %v511 = vrot.slane %v412, 5
  %v512 = vsel %vm504, %v510, %v511
  %v513 = vrot.slane %v413, 5
  %v514 = vsel %vm504, %v511, %v513
  %515 = vrot.lane.b32.xlu0 %v507, 32
  %v516 = vpop.permute.xlu0 %515
  %517 = vrot.lane.b32.xlu0 %v509, 32
  %v518 = vpop.permute.xlu0 %517
  %519 = vrot.lane.b32.xlu0 %v512, 32
  %v520 = vpop.permute.xlu0 %519
  %521 = vrot.lane.b32.xlu0 %v514, 32
  %v522 = vpop.permute.xlu0 %521
  %vm527 = vcmask 1041408
  %v528 = vrot.slane %v408, 6
  %v529 = vrot.slane %v409, 6
  %v530 = vsel %vm527, %v528, %v529
  %v531 = vrot.slane %v410, 6
  %v532 = vsel %vm527, %v529, %v531
  %v533 = vrot.slane %v411, 6
  %v534 = vrot.slane %v412, 6
  %v535 = vsel %vm527, %v533, %v534
  %v536 = vrot.slane %v413, 6
  %v537 = vsel %vm527, %v534, %v536
  %538 = vrot.lane.b32.xlu0 %v530, 64
  %v539 = vpop.permute.xlu0 %538
  %540 = vrot.lane.b32.xlu0 %v532, 64
  %v541 = vpop.permute.xlu0 %540
  %542 = vrot.lane.b32.xlu0 %v535, 64
  %v543 = vpop.permute.xlu0 %542
  %544 = vrot.lane.b32.xlu0 %v537, 64
  %v545 = vpop.permute.xlu0 %544
  %vm550 = vcmask 1040384
  %v551 = vrot.slane %v408, 7
  %v552 = vrot.slane %v409, 7
  %v553 = vsel %vm550, %v551, %v552
  %v554 = vrot.slane %v410, 7
  %v555 = vsel %vm550, %v552, %v554
  %v556 = vrot.slane %v411, 7
  %v557 = vrot.slane %v412, 7
  %v558 = vsel %vm550, %v556, %v557
  %v559 = vrot.slane %v413, 7
  %v560 = vsel %vm550, %v557, %v559
  %561 = vrot.lane.b32.xlu0 %v553, 96
  %v562 = vpop.permute.xlu0 %561
  %563 = vrot.lane.b32.xlu0 %v555, 96
  %v564 = vpop.permute.xlu0 %563
  %565 = vrot.lane.b32.xlu0 %v558, 96
  %v566 = vpop.permute.xlu0 %565
  %567 = vrot.lane.b32.xlu0 %v560, 96
  %v568 = vpop.permute.xlu0 %567
  %v573 = vsel %vm184, %v408, %v432
  %v574 = vsel %vm184, %v409, %v434
  %v575 = vsel %vm184, %v411, %v436
  %v576 = vsel %vm184, %v412, %v438
  %v577 = vsel %vm189, %v573, %v455
  %v578 = vsel %vm189, %v574, %v457
  %v579 = vsel %vm189, %v575, %v459
  %v580 = vsel %vm189, %v576, %v461
  %v581 = vsel %vm194, %v577, %v478
  %v582 = vsel %vm194, %v578, %v480
  %v583 = vsel %vm194, %v579, %v482
  %v584 = vsel %vm194, %v580, %v484
  %v585 = vsel %vm184, %v492, %v516
  %v586 = vsel %vm184, %v494, %v518
  %v587 = vsel %vm184, %v497, %v520
  %v588 = vsel %vm184, %v499, %v522
  %v589 = vsel %vm189, %v585, %v539
  %v590 = vsel %vm189, %v586, %v541
  %v591 = vsel %vm189, %v587, %v543
  %v592 = vsel %vm189, %v588, %v545
  %v593 = vsel %vm194, %v589, %v562
  %v594 = vsel %vm194, %v590, %v564
  %v595 = vsel %vm194, %v591, %v566
  %v596 = vsel %vm194, %v592, %v568
  %v597 = vpack.c.bf16 %v582, %v581
  %v598 = vpack.c.bf16 %v594, %v593
  %v599 = vpack.c.bf16 %v584, %v583
  %v600 = vpack.c.bf16 %v596, %v595
  %v601 = vld [vmem:[%s3] sm:$0xf]
  %v602 = vld [vmem:[%s3 + $0x4] sm:$0xf]
  %v603 = vld [vmem:[%s3 + $0x8] sm:$0xf]
  %v604 = vld [vmem:[%s3 + $0xc] sm:$0xf]
  %v605 = vld [vmem:[%s3 + $0x10] sm:$0xf]
  %v606 = vld [vmem:[%s3 + $0x14] sm:$0xf]
  %v607 = vld [vmem:[%s3 + $0x18] sm:$0xf]
  %v608 = vld [vmem:[%s3 + $0x1c] sm:$0xf]
  %v609 = vld [vmem:[%s3 + $0x20] sm:$0xf]
  %v610 = vld [vmem:[%s3 + $0x24] sm:$0xf]
  %v611 = vld [vmem:[%s3 + $0x28] sm:$0xf]
  %v612 = vld [vmem:[%s3 + $0x2c] sm:$0xf]
  %v613 = vld [vmem:[%s3 + $0x30] sm:$0xf]
  %v614 = vld [vmem:[%s3 + $0x34] sm:$0xf]
  %v615 = vld [vmem:[%s3 + $0x38] sm:$0xf]
  %v616 = vld [vmem:[%s3 + $0x3c] sm:$0xf]
  %v617 = vld [vmem:[%s3 + $0x40] sm:$0xf]
  %v618 = vld [vmem:[%s3 + $0x44] sm:$0xf]
  %v619 = vld [vmem:[%s3 + $0x48] sm:$0xf]
  %v620 = vld [vmem:[%s3 + $0x4c] sm:$0xf]
  %v621 = vld [vmem:[%s3 + $0x50] sm:$0xf]
  %v622 = vld [vmem:[%s3 + $0x54] sm:$0xf]
  %v623 = vld [vmem:[%s3 + $0x58] sm:$0xf]
  %v624 = vld [vmem:[%s3 + $0x5c] sm:$0xf]
  %v625 = vld [vmem:[%s3 + $0x60] sm:$0xf]
  %v626 = vld [vmem:[%s3 + $0x64] sm:$0xf]
  %v627 = vld [vmem:[%s3 + $0x68] sm:$0xf]
  %v628 = vld [vmem:[%s3 + $0x6c] sm:$0xf]
  %v629 = vld [vmem:[%s3 + $0x70] sm:$0xf]
  %v630 = vld [vmem:[%s3 + $0x74] sm:$0xf]
  %v631 = vld [vmem:[%s3 + $0x78] sm:$0xf]
  %v632 = vld [vmem:[%s3 + $0x7c] sm:$0xf]
  %v634 = vlaneseq
  %v635 = vshrl.u32 %v634, 7
  %v636 = vsub.s32 0, %v635
  %v637 = vrot.slane %v42, %v636
  %v671 = vunpack.c.l.b16 %v601
  %v672 = vunpack.c.l.b16 %v602
  %v673 = vunpack.c.l.b16 %v603
  %v674 = vunpack.c.l.b16 %v604
  %v675 = vunpack.c.l.b16 %v605
  %v676 = vunpack.c.l.b16 %v606
  %v677 = vunpack.c.l.b16 %v607
  %v678 = vunpack.c.l.b16 %v608
  %v679 = vunpack.c.l.b16 %v609
  %v680 = vunpack.c.l.b16 %v610
  %v681 = vunpack.c.l.b16 %v611
  %v682 = vunpack.c.l.b16 %v612
  %v683 = vunpack.c.l.b16 %v613
  %v684 = vunpack.c.l.b16 %v614
  %v685 = vunpack.c.l.b16 %v615
  %v686 = vunpack.c.l.b16 %v616
  %v687 = vunpack.c.l.b16 %v617
  %v688 = vunpack.c.l.b16 %v618
  %v689 = vunpack.c.l.b16 %v619
  %v690 = vunpack.c.l.b16 %v620
  %v691 = vunpack.c.l.b16 %v621
  %v692 = vunpack.c.l.b16 %v622
  %v693 = vunpack.c.l.b16 %v623
  %v694 = vunpack.c.l.b16 %v624
  %v695 = vunpack.c.l.b16 %v625
  %v696 = vunpack.c.l.b16 %v626
  %v697 = vunpack.c.l.b16 %v627
  %v698 = vunpack.c.l.b16 %v628
  %v699 = vunpack.c.l.b16 %v629
  %v700 = vunpack.c.l.b16 %v630
  %v701 = vunpack.c.l.b16 %v631
  %v702 = vunpack.c.l.b16 %v632
  %v703 = vpack.c.b16 %v672, %v671
  %v704 = vpack.c.b16 %v674, %v673
  %v705 = vpack.c.b16 %v676, %v675
  %v706 = vpack.c.b16 %v678, %v677
  %v707 = vpack.c.b16 %v680, %v679
  %v708 = vpack.c.b16 %v682, %v681
  %v709 = vpack.c.b16 %v684, %v683
  %v710 = vpack.c.b16 %v686, %v685
  %v711 = vpack.c.b16 %v688, %v687
  %v712 = vpack.c.b16 %v690, %v689
  %v713 = vpack.c.b16 %v692, %v691
  %v714 = vpack.c.b16 %v694, %v693
  %v715 = vpack.c.b16 %v696, %v695
  %v716 = vpack.c.b16 %v698, %v697
  %v717 = vpack.c.b16 %v700, %v699
  %v718 = vpack.c.b16 %v702, %v701
  %735 = vmatprep.subr.bf16.mxu0 0
  %736 = vmatpush1.bf16.msra.mxu0 %v703
  %737 = vmatprep.subr.bf16.mxu0 0
  %738 = vmatpush1.bf16.msra.mxu0 %v704
  %739 = vmatprep.subr.bf16.mxu0 0
  %740 = vmatpush1.bf16.msra.mxu0 %v705
  %741 = vmatprep.subr.bf16.mxu0 0
  %742 = vmatpush1.bf16.msra.mxu0 %v706
  %743 = vmatprep.subr.bf16.mxu0 0
  %744 = vmatpush1.bf16.msra.mxu0 %v707
  %745 = vmatprep.subr.bf16.mxu0 0
  %746 = vmatpush1.bf16.msra.mxu0 %v708
  %747 = vmatprep.subr.bf16.mxu0 0
  %748 = vmatpush1.bf16.msra.mxu0 %v709
  %749 = vmatprep.subr.bf16.mxu0 0
  %750 = vmatpush1.bf16.msra.mxu0 %v710
  %751 = vmatprep.subr.bf16.mxu0 0
  %752 = vmatpush1.bf16.msra.mxu0 %v711
  %753 = vmatprep.subr.bf16.mxu0 0
  %754 = vmatpush1.bf16.msra.mxu0 %v712
  %755 = vmatprep.subr.bf16.mxu0 0
  %756 = vmatpush1.bf16.msra.mxu0 %v713
  %757 = vmatprep.subr.bf16.mxu0 0
  %758 = vmatpush1.bf16.msra.mxu0 %v714
  %759 = vmatprep.subr.bf16.mxu0 0
  %760 = vmatpush1.bf16.msra.mxu0 %v715
  %761 = vmatprep.subr.bf16.mxu0 0
  %762 = vmatpush1.bf16.msra.mxu0 %v716
  %763 = vmatprep.subr.bf16.mxu0 0
  %764 = vmatpush1.bf16.msra.mxu0 %v717
  %765 = vmatprep.subr.bf16.mxu0 0
  %766 = vmatpush1.bf16.msra.mxu0 %v718
  %767 = vmatprep.mubr.bf16.mxu0 %v598
  %768 = vmatmul.mubr.bf16.gmra.mrb[0].mxu0 %v597
  %v769 = vpop.f32.mrb[0].mxu0
  %v770 = vadd.f32 %v637, %v769
  %v771 = vpop.f32.mrb[0].mxu0
  %v772 = vpop.f32.mrb[0].mxu0
  %v773 = vadd.f32 %v637, %v772
  %v774 = vpop.f32.mrb[0].mxu0
  %775 = vmatprep.mubr.bf16.mxu0 %v600
  %776 = vmatmul.mubr.bf16.gmra.mrb[0].mxu0 %v599
  %v777 = vpop.f32.mrb[0].mxu0
  %v778 = vadd.f32 %v637, %v777
  %v779 = vpop.f32.mrb[0].mxu0
  %v780 = vpop.f32.mrb[0].mxu0
  %v781 = vadd.f32 %v637, %v780
  %v782 = vpop.f32.mrb[0].mxu0
  %783 = vdwg.mxu0
  %v784 = vmax.f32 %v770, 0.0
  %v785 = vmax.f32 %v773, 0.0
  %v786 = vmax.f32 %v778, 0.0
  %v787 = vmax.f32 %v781, 0.0
  %788 = vst.msk [vmem:[#allocation2 + $0x3] sm:$0xff] %vm184, %v784
  %789 = vst.msk [vmem:[#allocation2 + $0xb] sm:$0xff] %vm184, %v785
  %790 = vst.msk [vmem:[#allocation2 + $0x1b] sm:$0xff] %vm184, %v786
  %791 = vst.msk [vmem:[#allocation2 + $0x23] sm:$0xff] %vm184, %v787
  %v792 = vld [vmem:[#allocation2] sm:$0xff]
  %v793 = vld [vmem:[#allocation2 + $0x8] sm:$0xff]
  %v794 = vld [vmem:[#allocation2 + $0x10] sm:$0x3f]
  %v795 = vld [vmem:[#allocation2 + $0x18] sm:$0xff]
  %v796 = vld [vmem:[#allocation2 + $0x20] sm:$0xff]
  %v797 = vld [vmem:[#allocation2 + $0x28] sm:$0x3f]
  %v804 = vrot.slane %v792, 1
  %v805 = vrot.slane %v793, 1
  %v806 = vsel %vm420, %v804, %v805
  %v807 = vrot.slane %v794, 1
  %v808 = vsel %vm420, %v805, %v807
  %v809 = vrot.slane %v795, 1
  %v810 = vrot.slane %v796, 1
  %v811 = vsel %vm420, %v809, %v810
  %v812 = vrot.slane %v797, 1
  %v813 = vsel %vm420, %v810, %v812
  %v820 = vmax.f32 %v792, %v806
  %v821 = vmax.f32 %v793, %v808
  %v822 = vmax.f32 %v794, %v807
  %v823 = vmax.f32 %v795, %v811
  %v824 = vmax.f32 %v796, %v813
  %v825 = vmax.f32 %v797, %v812
  %v832 = vrot.slane %v820, 2
  %v833 = vrot.slane %v821, 2
  %v834 = vsel %vm443, %v832, %v833
  %v835 = vrot.slane %v822, 2
  %v836 = vsel %vm443, %v833, %v835
  %v837 = vrot.slane %v823, 2
  %v838 = vrot.slane %v824, 2
  %v839 = vsel %vm443, %v837, %v838
  %v840 = vrot.slane %v825, 2
  %v841 = vsel %vm443, %v838, %v840
  %v848 = vmax.f32 %v820, %v834
  %v849 = vmax.f32 %v821, %v836
  %v850 = vmax.f32 %v822, %v835
  %v851 = vmax.f32 %v823, %v839
  %v852 = vmax.f32 %v824, %v841
  %v853 = vmax.f32 %v825, %v840
  %v860 = vrot.slane %v848, 3
  %v861 = vrot.slane %v849, 3
  %v862 = vsel %vm466, %v860, %v861
  %v863 = vrot.slane %v850, 3
  %v864 = vsel %vm466, %v861, %v863
  %v865 = vrot.slane %v851, 3
  %v866 = vrot.slane %v852, 3
  %v867 = vsel %vm466, %v865, %v866
  %v868 = vrot.slane %v853, 3
  %v869 = vsel %vm466, %v866, %v868
  %v874 = vmax.f32 %v848, %v862
  %v875 = vmax.f32 %v849, %v864
  %v876 = vmax.f32 %v851, %v867
  %v877 = vmax.f32 %v852, %v869
  %v878 = vcombine.high %v874, 0.0
  %v880 = vunpack.c.l.s4 1983009808
  %v881 = vunpack.c.0.s8 %v880
  %v882 = vlaneseq
  %v883 = vshrl.u32 %v882, 7
  %v884 = vsub.s32 %v881, %v883
  %v885 = vrot.slane %v874, %v884
  %v887 = vunpack.c.l.s4 1983009808
  %v888 = vunpack.c.0.s8 %v887
  %v889 = vlaneseq
  %v890 = vshrl.u32 %v889, 7
  %v891 = vsub.s32 %v888, %v890
  %v892 = vrot.slane %v878, %v891
  %v893 = vcombine.high %v876, 0.0
  %v895 = vunpack.c.l.s4 1983009808
  %v896 = vunpack.c.0.s8 %v895
  %v897 = vlaneseq
  %v898 = vshrl.u32 %v897, 7
  %v899 = vsub.s32 %v896, %v898
  %v900 = vrot.slane %v876, %v899
  %v902 = vunpack.c.l.s4 1983009808
  %v903 = vunpack.c.0.s8 %v902
  %v904 = vlaneseq
  %v905 = vshrl.u32 %v904, 7
  %v906 = vsub.s32 %v903, %v905
  %v907 = vrot.slane %v893, %v906
  %v908 = vcombine.low %v885, %v900
  %v909 = vcombine.high %v885, %v900
  %v911 = vunpack.c.l.s4 1934713408
  %v912 = vunpack.c.0.s8 %v911
  %v913 = vlaneseq
  %v914 = vshrl.u32 %v913, 7
  %v915 = vsub.s32 %v912, %v914
  %v916 = vrot.slane %v908, %v915
  %v918 = vunpack.c.l.s4 1934713408
  %v919 = vunpack.c.0.s8 %v918
  %v920 = vlaneseq
  %v921 = vshrl.u32 %v920, 7
  %v922 = vsub.s32 %v919, %v921
  %v923 = vrot.slane %v909, %v922
  %v924 = vcombine.low %v892, %v907
  %v925 = vcombine.high %v892, %v907
  %v927 = vunpack.c.l.s4 1934713408
  %v928 = vunpack.c.0.s8 %v927
  %v929 = vlaneseq
  %v930 = vshrl.u32 %v929, 7
  %v931 = vsub.s32 %v928, %v930
  %v932 = vrot.slane %v924, %v931
  %v934 = vunpack.c.l.s4 1934713408
  %v935 = vunpack.c.0.s8 %v934
  %v936 = vlaneseq
  %v937 = vshrl.u32 %v936, 7
  %v938 = vsub.s32 %v935, %v937
  %v939 = vrot.slane %v925, %v938
  %v940 = vcombine.high %v916, 0.0
  %v941 = vcombine.high %v923, 0.0
  %v942 = vcombine.high %v932, 0.0
  %v943 = vcombine.high %v939, 0.0
  %v944 = vcombine.high %v875, 0.0
  %v946 = vunpack.c.l.s4 1983009808
  %v947 = vunpack.c.0.s8 %v946
  %v948 = vlaneseq
  %v949 = vshrl.u32 %v948, 7
  %v950 = vsub.s32 %v947, %v949
  %v951 = vrot.slane %v875, %v950
  %v953 = vunpack.c.l.s4 1983009808
  %v954 = vunpack.c.0.s8 %v953
  %v955 = vlaneseq
  %v956 = vshrl.u32 %v955, 7
  %v957 = vsub.s32 %v954, %v956
  %v958 = vrot.slane %v944, %v957
  %v959 = vcombine.high %v877, 0.0
  %v961 = vunpack.c.l.s4 1983009808
  %v962 = vunpack.c.0.s8 %v961
  %v963 = vlaneseq
  %v964 = vshrl.u32 %v963, 7
  %v965 = vsub.s32 %v962, %v964
  %v966 = vrot.slane %v877, %v965
  %v968 = vunpack.c.l.s4 1983009808
  %v969 = vunpack.c.0.s8 %v968
  %v970 = vlaneseq
  %v971 = vshrl.u32 %v970, 7
  %v972 = vsub.s32 %v969, %v971
  %v973 = vrot.slane %v959, %v972
  %v974 = vcombine.low %v951, %v966
  %v975 = vcombine.high %v951, %v966
  %v977 = vunpack.c.l.s4 1934713408
  %v978 = vunpack.c.0.s8 %v977
  %v979 = vlaneseq
  %v980 = vshrl.u32 %v979, 7
  %v981 = vsub.s32 %v978, %v980
  %v982 = vrot.slane %v974, %v981
  %v984 = vunpack.c.l.s4 1934713408
  %v985 = vunpack.c.0.s8 %v984
  %v986 = vlaneseq
  %v987 = vshrl.u32 %v986, 7
  %v988 = vsub.s32 %v985, %v987
  %v989 = vrot.slane %v975, %v988
  %v990 = vcombine.low %v958, %v973
  %v991 = vcombine.high %v958, %v973
  %v993 = vunpack.c.l.s4 1934713408
  %v994 = vunpack.c.0.s8 %v993
  %v995 = vlaneseq
  %v996 = vshrl.u32 %v995, 7
  %v997 = vsub.s32 %v994, %v996
  %v998 = vrot.slane %v990, %v997
  %v1000 = vunpack.c.l.s4 1934713408
  %v1001 = vunpack.c.0.s8 %v1000
  %v1002 = vlaneseq
  %v1003 = vshrl.u32 %v1002, 7
  %v1004 = vsub.s32 %v1001, %v1003
  %v1005 = vrot.slane %v991, %v1004
  %v1006 = vcombine.high %v982, 0.0
  %v1007 = vcombine.high %v989, 0.0
  %v1008 = vcombine.high %v998, 0.0
  %v1009 = vcombine.high %v1005, 0.0
  %1011 = vrot.lane.b32.xlu0 %v940, 32
  %v1012 = vpop.permute.xlu0 %1011
  %1015 = vrot.lane.b32.xlu0 %v923, 64
  %v1016 = vpop.permute.xlu0 %1015
  %1019 = vrot.lane.b32.xlu0 %v941, 96
  %v1020 = vpop.permute.xlu0 %1019
  %1023 = vrot.lane.b32.xlu0 %v942, 32
  %v1024 = vpop.permute.xlu0 %1023
  %1027 = vrot.lane.b32.xlu0 %v939, 64
  %v1028 = vpop.permute.xlu0 %1027
  %1031 = vrot.lane.b32.xlu0 %v943, 96
  %v1032 = vpop.permute.xlu0 %1031
  %1035 = vrot.lane.b32.xlu0 %v1006, 32
  %v1036 = vpop.permute.xlu0 %1035
  %1039 = vrot.lane.b32.xlu0 %v989, 64
  %v1040 = vpop.permute.xlu0 %1039
  %1043 = vrot.lane.b32.xlu0 %v1007, 96
  %v1044 = vpop.permute.xlu0 %1043
  %1047 = vrot.lane.b32.xlu0 %v1008, 32
  %v1048 = vpop.permute.xlu0 %1047
  %1051 = vrot.lane.b32.xlu0 %v1005, 64
  %v1052 = vpop.permute.xlu0 %1051
  %1055 = vrot.lane.b32.xlu0 %v1009, 96
  %v1056 = vpop.permute.xlu0 %1055
  %v1058 = vsel %vm184, %v916, %v1012
  %v1059 = vsel %vm189, %v1058, %v1016
  %v1060 = vsel %vm194, %v1059, %v1020
  %v1061 = vsel %vm184, %v932, %v1024
  %v1062 = vsel %vm189, %v1061, %v1028
  %v1063 = vsel %vm194, %v1062, %v1032
  %v1064 = vsel %vm184, %v982, %v1036
  %v1065 = vsel %vm189, %v1064, %v1040
  %v1066 = vsel %vm194, %v1065, %v1044
  %v1067 = vsel %vm184, %v998, %v1048
  %v1068 = vsel %vm189, %v1067, %v1052
  %v1069 = vsel %vm194, %v1068, %v1056
  %v1070 = vpack.c.bf16 %v1060, %v1060
  %v1071 = vpack.c.bf16 %v1063, %v1063
  %v1072 = vpack.c.bf16 %v1066, %v1066
  %v1073 = vpack.c.bf16 %v1069, %v1069
  %v1074 = vld [vmem:[%s5] sm:$0xf]
  %v1075 = vld [vmem:[%s5 + $0x4] sm:$0xf]
  %v1076 = vld [vmem:[%s5 + $0x8] sm:$0xf]
  %v1077 = vld [vmem:[%s5 + $0xc] sm:$0xf]
  %v1078 = vld [vmem:[%s5 + $0x10] sm:$0xf]
  %v1079 = vld [vmem:[%s5 + $0x14] sm:$0xf]
  %v1080 = vld [vmem:[%s5 + $0x18] sm:$0xf]
  %v1081 = vld [vmem:[%s5 + $0x1c] sm:$0xf]
  %v1082 = vld [vmem:[%s5 + $0x20] sm:$0xf]
  %v1083 = vld [vmem:[%s5 + $0x24] sm:$0xf]
  %v1084 = vld [vmem:[%s5 + $0x28] sm:$0xf]
  %v1085 = vld [vmem:[%s5 + $0x2c] sm:$0xf]
  %v1086 = vld [vmem:[%s5 + $0x30] sm:$0xf]
  %v1087 = vld [vmem:[%s5 + $0x34] sm:$0xf]
  %v1088 = vld [vmem:[%s5 + $0x38] sm:$0xf]
  %v1089 = vld [vmem:[%s5 + $0x3c] sm:$0xf]
  %v1090 = vld [vmem:[%s5 + $0x40] sm:$0xf]
  %v1091 = vld [vmem:[%s5 + $0x44] sm:$0xf]
  %v1092 = vld [vmem:[%s5 + $0x48] sm:$0xf]
  %v1093 = vld [vmem:[%s5 + $0x4c] sm:$0xf]
  %v1094 = vld [vmem:[%s5 + $0x50] sm:$0xf]
  %v1095 = vld [vmem:[%s5 + $0x54] sm:$0xf]
  %v1096 = vld [vmem:[%s5 + $0x58] sm:$0xf]
  %v1097 = vld [vmem:[%s5 + $0x5c] sm:$0xf]
  %v1098 = vld [vmem:[%s5 + $0x60] sm:$0xf]
  %v1099 = vld [vmem:[%s5 + $0x64] sm:$0xf]
  %v1100 = vld [vmem:[%s5 + $0x68] sm:$0xf]
  %v1101 = vld [vmem:[%s5 + $0x6c] sm:$0xf]
  %v1102 = vld [vmem:[%s5 + $0x70] sm:$0xf]
  %v1103 = vld [vmem:[%s5 + $0x74] sm:$0xf]
  %v1104 = vld [vmem:[%s5 + $0x78] sm:$0xf]
  %v1105 = vld [vmem:[%s5 + $0x7c] sm:$0xf]
  %v1106 = vld [vmem:[%s5 + $0x80] sm:$0xf]
  %v1107 = vld [vmem:[%s5 + $0x84] sm:$0xf]
  %v1108 = vld [vmem:[%s5 + $0x88] sm:$0xf]
  %v1109 = vld [vmem:[%s5 + $0x8c] sm:$0xf]
  %v1110 = vld [vmem:[%s5 + $0x90] sm:$0xf]
  %v1111 = vld [vmem:[%s5 + $0x94] sm:$0xf]
  %v1112 = vld [vmem:[%s5 + $0x98] sm:$0xf]
  %v1113 = vld [vmem:[%s5 + $0x9c] sm:$0xf]
  %v1114 = vld [vmem:[%s5 + $0xa0] sm:$0xf]
  %v1115 = vld [vmem:[%s5 + $0xa4] sm:$0xf]
  %v1116 = vld [vmem:[%s5 + $0xa8] sm:$0xf]
  %v1117 = vld [vmem:[%s5 + $0xac] sm:$0xf]
  %v1118 = vld [vmem:[%s5 + $0xb0] sm:$0xf]
  %v1119 = vld [vmem:[%s5 + $0xb4] sm:$0xf]
  %v1120 = vld [vmem:[%s5 + $0xb8] sm:$0xf]
  %v1121 = vld [vmem:[%s5 + $0xbc] sm:$0xf]
  %v1122 = vld [vmem:[%s5 + $0xc0] sm:$0xf]
  %v1123 = vld [vmem:[%s5 + $0xc4] sm:$0xf]
  %v1124 = vld [vmem:[%s5 + $0xc8] sm:$0xf]
  %v1125 = vld [vmem:[%s5 + $0xcc] sm:$0xf]
  %v1126 = vld [vmem:[%s5 + $0xd0] sm:$0xf]
  %v1127 = vld [vmem:[%s5 + $0xd4] sm:$0xf]
  %v1128 = vld [vmem:[%s5 + $0xd8] sm:$0xf]
  %v1129 = vld [vmem:[%s5 + $0xdc] sm:$0xf]
  %v1130 = vld [vmem:[%s5 + $0xe0] sm:$0xf]
  %v1131 = vld [vmem:[%s5 + $0xe4] sm:$0xf]
  %v1132 = vld [vmem:[%s5 + $0xe8] sm:$0xf]
  %v1133 = vld [vmem:[%s5 + $0xec] sm:$0xf]
  %v1134 = vld [vmem:[%s5 + $0xf0] sm:$0xf]
  %v1135 = vld [vmem:[%s5 + $0xf4] sm:$0xf]
  %v1136 = vld [vmem:[%s5 + $0xf8] sm:$0xf]
  %v1137 = vld [vmem:[%s5 + $0xfc] sm:$0xf]
  %v1138 = vld [vmem:[%s6] sm:$0x1]
  %v1140 = vlaneseq
  %v1141 = vshrl.u32 %v1140, 7
  %v1142 = vsub.s32 0, %v1141
  %v1143 = vrot.slane %v1138, %v1142
  %v1209 = vunpack.c.l.b16 %v1074
  %v1210 = vunpack.c.l.b16 %v1075
  %v1211 = vunpack.c.l.b16 %v1076
  %v1212 = vunpack.c.l.b16 %v1077
  %v1213 = vunpack.c.l.b16 %v1078
  %v1214 = vunpack.c.l.b16 %v1079
  %v1215 = vunpack.c.l.b16 %v1080
  %v1216 = vunpack.c.l.b16 %v1081
  %v1217 = vunpack.c.l.b16 %v1082
  %v1218 = vunpack.c.l.b16 %v1083
  %v1219 = vunpack.c.l.b16 %v1084
  %v1220 = vunpack.c.l.b16 %v1085
  %v1221 = vunpack.c.l.b16 %v1086
  %v1222 = vunpack.c.l.b16 %v1087
  %v1223 = vunpack.c.l.b16 %v1088
  %v1224 = vunpack.c.l.b16 %v1089
  %v1225 = vunpack.c.l.b16 %v1090
  %v1226 = vunpack.c.l.b16 %v1091
  %v1227 = vunpack.c.l.b16 %v1092
  %v1228 = vunpack.c.l.b16 %v1093
  %v1229 = vunpack.c.l.b16 %v1094
  %v1230 = vunpack.c.l.b16 %v1095
  %v1231 = vunpack.c.l.b16 %v1096
  %v1232 = vunpack.c.l.b16 %v1097
  %v1233 = vunpack.c.l.b16 %v1098
  %v1234 = vunpack.c.l.b16 %v1099
  %v1235 = vunpack.c.l.b16 %v1100
  %v1236 = vunpack.c.l.b16 %v1101
  %v1237 = vunpack.c.l.b16 %v1102
  %v1238 = vunpack.c.l.b16 %v1103
  %v1239 = vunpack.c.l.b16 %v1104
  %v1240 = vunpack.c.l.b16 %v1105
  %v1241 = vunpack.c.l.b16 %v1106
  %v1242 = vunpack.c.l.b16 %v1107
  %v1243 = vunpack.c.l.b16 %v1108
  %v1244 = vunpack.c.l.b16 %v1109
  %v1245 = vunpack.c.l.b16 %v1110
  %v1246 = vunpack.c.l.b16 %v1111
  %v1247 = vunpack.c.l.b16 %v1112
  %v1248 = vunpack.c.l.b16 %v1113
  %v1249 = vunpack.c.l.b16 %v1114
  %v1250 = vunpack.c.l.b16 %v1115
  %v1251 = vunpack.c.l.b16 %v1116
  %v1252 = vunpack.c.l.b16 %v1117
  %v1253 = vunpack.c.l.b16 %v1118
  %v1254 = vunpack.c.l.b16 %v1119
  %v1255 = vunpack.c.l.b16 %v1120
  %v1256 = vunpack.c.l.b16 %v1121
  %v1257 = vunpack.c.l.b16 %v1122
  %v1258 = vunpack.c.l.b16 %v1123
  %v1259 = vunpack.c.l.b16 %v1124
  %v1260 = vunpack.c.l.b16 %v1125
  %v1261 = vunpack.c.l.b16 %v1126
  %v1262 = vunpack.c.l.b16 %v1127
  %v1263 = vunpack.c.l.b16 %v1128
  %v1264 = vunpack.c.l.b16 %v1129
  %v1265 = vunpack.c.l.b16 %v1130
  %v1266 = vunpack.c.l.b16 %v1131
  %v1267 = vunpack.c.l.b16 %v1132
  %v1268 = vunpack.c.l.b16 %v1133
  %v1269 = vunpack.c.l.b16 %v1134
  %v1270 = vunpack.c.l.b16 %v1135
  %v1271 = vunpack.c.l.b16 %v1136
  %v1272 = vunpack.c.l.b16 %v1137
  %v1273 = vpack.c.b16 %v1210, %v1209
  %v1274 = vpack.c.b16 %v1212, %v1211
  %v1275 = vpack.c.b16 %v1214, %v1213
  %v1276 = vpack.c.b16 %v1216, %v1215
  %v1277 = vpack.c.b16 %v1218, %v1217
  %v1278 = vpack.c.b16 %v1220, %v1219
  %v1279 = vpack.c.b16 %v1222, %v1221
  %v1280 = vpack.c.b16 %v1224, %v1223
  %v1281 = vpack.c.b16 %v1226, %v1225
  %v1282 = vpack.c.b16 %v1228, %v1227
  %v1283 = vpack.c.b16 %v1230, %v1229
  %v1284 = vpack.c.b16 %v1232, %v1231
  %v1285 = vpack.c.b16 %v1234, %v1233
  %v1286 = vpack.c.b16 %v1236, %v1235
  %v1287 = vpack.c.b16 %v1238, %v1237
  %v1288 = vpack.c.b16 %v1240, %v1239
  %v1289 = vpack.c.b16 %v1242, %v1241
  %v1290 = vpack.c.b16 %v1244, %v1243
  %v1291 = vpack.c.b16 %v1246, %v1245
  %v1292 = vpack.c.b16 %v1248, %v1247
  %v1293 = vpack.c.b16 %v1250, %v1249
  %v1294 = vpack.c.b16 %v1252, %v1251
  %v1295 = vpack.c.b16 %v1254, %v1253
  %v1296 = vpack.c.b16 %v1256, %v1255
  %v1297 = vpack.c.b16 %v1258, %v1257
  %v1298 = vpack.c.b16 %v1260, %v1259
  %v1299 = vpack.c.b16 %v1262, %v1261
  %v1300 = vpack.c.b16 %v1264, %v1263
  %v1301 = vpack.c.b16 %v1266, %v1265
  %v1302 = vpack.c.b16 %v1268, %v1267
  %v1303 = vpack.c.b16 %v1270, %v1269
  %v1304 = vpack.c.b16 %v1272, %v1271
  %1337 = vmatprep.subr.bf16.mxu0 0
  %1338 = vmatpush1.bf16.msra.mxu0 %v1273
  %1339 = vmatprep.subr.bf16.mxu0 0
  %1340 = vmatpush1.bf16.msra.mxu0 %v1274
  %1341 = vmatprep.subr.bf16.mxu0 0
  %1342 = vmatpush1.bf16.msra.mxu0 %v1275
  %1343 = vmatprep.subr.bf16.mxu0 0
  %1344 = vmatpush1.bf16.msra.mxu0 %v1276
  %1345 = vmatprep.subr.bf16.mxu0 0
  %1346 = vmatpush1.bf16.msra.mxu0 %v1277
  %1347 = vmatprep.subr.bf16.mxu0 0
  %1348 = vmatpush1.bf16.msra.mxu0 %v1278
  %1349 = vmatprep.subr.bf16.mxu0 0
  %1350 = vmatpush1.bf16.msra.mxu0 %v1279
  %1351 = vmatprep.subr.bf16.mxu0 0
  %1352 = vmatpush1.bf16.msra.mxu0 %v1280
  %1353 = vmatprep.subr.bf16.mxu0 0
  %1354 = vmatpush1.bf16.msra.mxu0 %v1281
  %1355 = vmatprep.subr.bf16.mxu0 0
  %1356 = vmatpush1.bf16.msra.mxu0 %v1282
  %1357 = vmatprep.subr.bf16.mxu0 0
  %1358 = vmatpush1.bf16.msra.mxu0 %v1283
  %1359 = vmatprep.subr.bf16.mxu0 0
  %1360 = vmatpush1.bf16.msra.mxu0 %v1284
  %1361 = vmatprep.subr.bf16.mxu0 0
  %1362 = vmatpush1.bf16.msra.mxu0 %v1285
  %1363 = vmatprep.subr.bf16.mxu0 0
  %1364 = vmatpush1.bf16.msra.mxu0 %v1286
  %1365 = vmatprep.subr.bf16.mxu0 0
  %1366 = vmatpush1.bf16.msra.mxu0 %v1287
  %1367 = vmatprep.subr.bf16.mxu0 0
  %1368 = vmatpush1.bf16.msra.mxu0 %v1288
  %1369 = vmatprep.mubr.bf16.mxu0 %v1071
  %1370 = vmatmul.mubr.bf16.gmra.mrb[0].mxu0 %v1070
  %v1371 = vpop.f32.mrb[0].mxu0
  %v1372 = vadd.f32 %v1143, %v1371
  %v1373 = vpop.f32.mrb[0].mxu0
  %v1374 = vpop.f32.mrb[0].mxu0
  %v1375 = vpop.f32.mrb[0].mxu0
  %1376 = vdwg.mxu0
  %1377 = vmatprep.subr.bf16.mxu0 0
  %1378 = vmatpush1.bf16.msra.mxu0 %v1289
  %1379 = vmatprep.subr.bf16.mxu0 0
  %1380 = vmatpush1.bf16.msra.mxu0 %v1290
  %1381 = vmatprep.subr.bf16.mxu0 0
  %1382 = vmatpush1.bf16.msra.mxu0 %v1291
  %1383 = vmatprep.subr.bf16.mxu0 0
  %1384 = vmatpush1.bf16.msra.mxu0 %v1292
  %1385 = vmatprep.subr.bf16.mxu0 0
  %1386 = vmatpush1.bf16.msra.mxu0 %v1293
  %1387 = vmatprep.subr.bf16.mxu0 0
  %1388 = vmatpush1.bf16.msra.mxu0 %v1294
  %1389 = vmatprep.subr.bf16.mxu0 0
  %1390 = vmatpush1.bf16.msra.mxu0 %v1295
  %1391 = vmatprep.subr.bf16.mxu0 0
  %1392 = vmatpush1.bf16.msra.mxu0 %v1296
  %1393 = vmatprep.subr.bf16.mxu0 0
  %1394 = vmatpush1.bf16.msra.mxu0 %v1297
  %1395 = vmatprep.subr.bf16.mxu0 0
  %1396 = vmatpush1.bf16.msra.mxu0 %v1298
  %1397 = vmatprep.subr.bf16.mxu0 0
  %1398 = vmatpush1.bf16.msra.mxu0 %v1299
  %1399 = vmatprep.subr.bf16.mxu0 0
  %1400 = vmatpush1.bf16.msra.mxu0 %v1300
  %1401 = vmatprep.subr.bf16.mxu0 0
  %1402 = vmatpush1.bf16.msra.mxu0 %v1301
  %1403 = vmatprep.subr.bf16.mxu0 0
  %1404 = vmatpush1.bf16.msra.mxu0 %v1302
  %1405 = vmatprep.subr.bf16.mxu0 0
  %1406 = vmatpush1.bf16.msra.mxu0 %v1303
  %1407 = vmatprep.subr.bf16.mxu0 0
  %1408 = vmatpush1.bf16.msra.mxu0 %v1304
  %1409 = vmatprep.mubr.bf16.mxu0 %v1073
  %1410 = vmatmul.mubr.bf16.gmra.mrb[0].mxu0 %v1072
  %v1411 = vpop.f32.mrb[0].mxu0
  %v1412 = vadd.f32 %v1372, %v1411
  %v1413 = vpop.f32.mrb[0].mxu0
  %v1414 = vpop.f32.mrb[0].mxu0
  %v1415 = vpop.f32.mrb[0].mxu0
  %1416 = vdwg.mxu0
  %v1417 = vmax.f32 %v1412, 0.0
  %v1418 = vld [vmem:[%s7] sm:$0x1]
  %v1420 = vlaneseq
  %v1421 = vshrl.u32 %v1420, 7
  %v1422 = vsub.s32 0, %v1421
  %v1423 = vrot.slane %v1418, %v1422
  %v1425 = vmul.f32 %v1417, %v1423
  %vm1426 = vcmask 517120
  %v1427 = vsel %vm1426, %v1425, 0.0
  %1428 = vadd.xlane.f32.xlu0 %v1427
  %v1429 = vpop.xlane.xlu0 %1428
  %v1430 = vld [vmem:[#allocation3] sm:$0x1]
  %v1432 = vlaneseq
  %v1433 = vshrl.u32 %v1432, 7
  %v1434 = vsub.s32 0, %v1433
  %v1435 = vrot.slane %v1430, %v1434
  %v1437 = vadd.f32 %v1429, %v1435
  %1439 = vset.pattern.permute.xlu0 0
  %1440 = vperm.xlu0 %1439, %v1437
  %v1441 = vpop.permute.xlu0 %1440
  %v1442 = vlaneseq
  %v1443 = vshrl.u32 %v1442, 7
  %v1444 = vsub.s32 0, %v1443
  %v1445 = vrot.slane %v1441, %v1444
  %v1446 = vlaneseq
  %v1447 = vshrl.u32 %v1446, 7
  %v1448 = vsub.s32 1, %v1447
  %v1449 = vrot.slane %v1441, %v1448
  %1452 = vst [vmem:[%s9] sm:$0x1] %v1445
  %1453 = vst [vmem:[%s9 + $0x1] sm:$0x1] %v1449
  // Predicated region
  $region38: #{expression_predictor_forward.1} parent=0 // pred_check
    _
  $region39: #{expression_predictor_forward.1} parent=0 // pred_check_branch
    %1455 = sbr.rel (0) target = $region41
  $region40: #{expression_predictor_forward.1} parent=0 // pred_region
    _
  $region41: #{expression_predictor_forward.1} parent=0 // pred_fallthru
    _
  // Predicated region
  $region42: #{expression_predictor_forward.1} parent=0 // pred_check
    _
  $region43: #{expression_predictor_forward.1} parent=0 // pred_check_branch
    %1457 = sbr.rel (0) target = $region45
  $region44: #{expression_predictor_forward.1} parent=0 // pred_region
    _
  $region45: #{expression_predictor_forward.1} parent=0 // pred_fallthru
    _

</llo_original>
